<compile_context>
chip_gen: v7x
topology: tpu7x:2x2x1
jax: 0.10.0
libtpu: 0.0.40
codegen_flags: <defaults>
</compile_context>

<pallas_src>
import functools

import jax
import jax.numpy as jnp
from jax import lax
from jax.experimental import pallas as pl
from jax.experimental.pallas import tpu as pltpu


def _lstm_kernel(x_ref,                        # (S*B, F)  bf16
                 wih0_ref, whh0_ref, b0_ref,   # (F,4H) bf16, (H,4H) bf16, (1,4H) f32
                 wih1_ref, whh1_ref, b1_ref,   # (H,4H) bf16, (H,4H) bf16, (1,4H) f32
                 w1_ref, bd1_ref,              # (H, Dh) f32, (1, Dh) f32
                 w2_ref, bd2_ref,              # (Dh, O) f32, (1, O) f32
                 out_ref,                      # (B, O)  f32
                 *, seq, batch):
    S = seq
    B = batch
    H = whh0_ref.shape[0]

    # ---- Hoisted, loop-invariant loads (read each weight/bias exactly once).
    whh0 = whh0_ref[...]
    wih1 = wih1_ref[...]
    whh1 = whh1_ref[...]
    b1 = b1_ref[...]

    def cell(pre_t, h_bf, c, whh_bf):
        # pre_t already contains x_t @ W_ih + (b_ih + b_hh); only the recurrent
        # matmul sits on the per-timestep dependent chain.  Written as
        # pre + dot so Mosaic may fuse the add into the MXU accumulate (v7x MRB).
        gates = pre_t + jnp.dot(h_bf, whh_bf,
                                preferred_element_type=jnp.float32)    # (B,4H) f32
        # sigmoid(x) = 0.5*tanh(0.5*x) + 0.5 -> both activations are single
        # full-width EUP tanh pushes; they are independent so they pipeline.
        sig = 0.5 * jnp.tanh(0.5 * gates) + 0.5
        th = jnp.tanh(gates)
        i = sig[:, 0 * H:1 * H]
        f = sig[:, 1 * H:2 * H]
        o = sig[:, 3 * H:4 * H]
        g = th[:, 2 * H:3 * H]
        c_new = f * c + i * g
        h_new = o * jnp.tanh(c_new)
        # Carry h in bf16 (MXU operand dtype); cast happens exactly once here.
        return h_new, h_new.astype(jnp.bfloat16), c_new

    zeros_f = jnp.zeros((B, H), jnp.float32)
    zeros_bf = jnp.zeros((B, H), jnp.bfloat16)

    # ---- Layer-0 input projection: one MXU op for all S timesteps, then a
    #      one-time split into per-step (B,4H) operands (keeps the 2-row
    #      sublane extracts off the recurrent dependent chain).
    pre0 = jnp.dot(x_ref[...], wih0_ref[...],
                   preferred_element_type=jnp.float32) + b0_ref[...]    # (S*B,4H)
    pre0_steps = jnp.split(pre0, S, axis=0)                             # S x (B,4H)

    # ---- Wavefront interleave of the two layers (fully unrolled, S static).
    #      Dependent chain ~ S+1 cells; per-step layer-1 input projection is
    #      independent of layer-1's h-chain and overlaps with layer-0's next
    #      recurrent matmul.  No VMEM scratch for the layer-0 hidden sequence.
    h0_bf, c0 = zeros_bf, zeros_f
    h1, h1_bf, c1 = zeros_f, zeros_bf, zeros_f
    for t in range(S):
        _, h0_bf, c0 = cell(pre0_steps[t], h0_bf, c0, whh0)
        pre1_t = jnp.dot(h0_bf, wih1, preferred_element_type=jnp.float32) + b1
        h1, h1_bf, c1 = cell(pre1_t, h1_bf, c1, whh1)

    # ---- Dense head: Linear -> ReLU -> (Dropout = identity) -> Linear (f32).
    z = jnp.maximum(
        jnp.dot(h1, w1_ref[...], preferred_element_type=jnp.float32)
        + bd1_ref[...], 0.0)
    out_ref[...] = (jnp.dot(z, w2_ref[...], preferred_element_type=jnp.float32)
                    + bd2_ref[...])


def lstm_forward(x, params, *, output_dim):
    """x: (batch, series_length, num_features) float32."""
    batch, seq, feat = x.shape
    # Match torch `.contiguous().view(seq, batch, -1)` exactly: a row-major
    # reshape (NOT a transpose), then flatten (seq, batch) into rows so the
    # kernel's hoisted input projection is a single (S*B, F) @ (F, 4H) matmul.
    # Pre-cast to bf16 (MXU operand dtype) so the x DMA is half-width.
    x_rows = jnp.reshape(x, (seq * batch, feat)).astype(jnp.bfloat16)

    operands = (
        x_rows,
        params["wih0T"], params["whh0T"], params["b0"],
        params["wih1T"], params["whh1T"], params["b1"],
        params["w1T"], params["bd1"],
        params["w2T"], params["bd2"],
    )

    vmem = pl.BlockSpec(memory_space=pltpu.MemorySpace.VMEM)
    kernel = functools.partial(_lstm_kernel, seq=seq, batch=batch)
    # No grid / pipelining on purpose: total operand footprint is tiny, so all
    # operands are VMEM-resident and the HBM->VMEM copy is a one-shot prologue.
    return pl.pallas_call(
        kernel,
        out_shape=jax.ShapeDtypeStruct((batch, output_dim), jnp.float32),
        in_specs=[vmem] * len(operands),
        out_specs=vmem,
    )(*operands)


def init_params(key, num_features, hidden_dim, dense_hidden, output_dim):
    """Deterministic synthetic parameters, PyTorch-style uniform(-1/sqrt(H), 1/sqrt(H)).

    LSTM weight matrices are pre-transposed and pre-cast to bf16 (MXU operand
    dtype); biases are folded (b_ih + b_hh) and kept in f32.  Dense head f32.
    """
    ks = jax.random.split(key, 14)
    bound = 1.0 / jnp.sqrt(jnp.float32(hidden_dim))
    u = lambda k, shape: jax.random.uniform(k, shape, jnp.float32, -bound, bound)

    # Layer 0 (input_size = num_features), gate order (i, f, g, o) as in PyTorch.
    wih0 = u(ks[0], (4 * hidden_dim, num_features))
    whh0 = u(ks[1], (4 * hidden_dim, hidden_dim))
    bih0 = u(ks[2], (4 * hidden_dim,))
    bhh0 = u(ks[3], (4 * hidden_dim,))
    # Layer 1 (input_size = hidden_dim).
    wih1 = u(ks[4], (4 * hidden_dim, hidden_dim))
    whh1 = u(ks[5], (4 * hidden_dim, hidden_dim))
    bih1 = u(ks[6], (4 * hidden_dim,))
    bhh1 = u(ks[7], (4 * hidden_dim,))
    # Dense head (kept in f32).
    bd = 1.0 / jnp.sqrt(jnp.float32(hidden_dim))
    w1 = jax.random.uniform(ks[8], (dense_hidden, hidden_dim), jnp.float32, -bd, bd)
    b1 = jax.random.uniform(ks[9], (dense_hidden,), jnp.float32, -bd, bd)
    bd2 = 1.0 / jnp.sqrt(jnp.float32(dense_hidden))
    w2 = jax.random.uniform(ks[10], (output_dim, dense_hidden), jnp.float32, -bd2, bd2)
    b2 = jax.random.uniform(ks[11], (output_dim,), jnp.float32, -bd2, bd2)

    bf16 = jnp.bfloat16
    return dict(
        wih0T=wih0.T.astype(bf16), whh0T=whh0.T.astype(bf16),
        b0=(bih0 + bhh0).reshape(1, -1),
        wih1T=wih1.T.astype(bf16), whh1T=whh1.T.astype(bf16),
        b1=(bih1 + bhh1).reshape(1, -1),
        w1T=w1.T, bd1=b1.reshape(1, -1),
        w2T=w2.T, bd2=b2.reshape(1, -1),
    )


def _reference_forward(x, params):
    """Pure-JAX reference in matching precision (bf16 matmul operands, f32 accum)."""
    batch, seq, feat = x.shape
    H = params["whh0T"].shape[0]
    x_seq = jnp.reshape(x, (seq, batch, feat))

    def run_layer(inputs, wihT, whhT, b):
        def step(carry, x_t):
            h, c = carry
            gates = (jnp.dot(x_t.astype(wihT.dtype), wihT,
                             preferred_element_type=jnp.float32)
                     + jnp.dot(h.astype(whhT.dtype), whhT,
                               preferred_element_type=jnp.float32)
                     + b)
            i = jax.nn.sigmoid(gates[:, 0 * H:1 * H])
            f = jax.nn.sigmoid(gates[:, 1 * H:2 * H])
            g = jnp.tanh(gates[:, 2 * H:3 * H])
            o = jax.nn.sigmoid(gates[:, 3 * H:4 * H])
            c = f * c + i * g
            h = o * jnp.tanh(c)
            return (h, c), h
        init = (jnp.zeros((batch, H), jnp.float32),
                jnp.zeros((batch, H), jnp.float32))
        _, hs = lax.scan(step, init, inputs)
        return hs

    h0_seq = run_layer(x_seq, params["wih0T"], params["whh0T"], params["b0"])
    h1_seq = run_layer(h0_seq, params["wih1T"], params["whh1T"], params["b1"])
    h = h1_seq[-1]
    z = jnp.maximum(h @ params["w1T"] + params["bd1"], 0.0)
    return z @ params["w2T"] + params["bd2"]


if __name__ == "__main__":
    num_features = 4
    hidden_dim = 32
    dense_hidden = 16
    output_dim = 3
    batch_size = 2
    series_length = 8

    key = jax.random.PRNGKey(0)
    k_x, k_p = jax.random.split(key)
    x = jax.random.normal(k_x, (batch_size, series_length, num_features), jnp.float32)
    params = init_params(k_p, num_features, hidden_dim, dense_hidden, output_dim)

    out = lstm_forward(x, params, output_dim=output_dim)
    out = jax.block_until_ready(out)

    ref = _reference_forward(x, params)
    assert out.shape == (batch_size, output_dim)
    assert jnp.allclose(out, ref, atol=1e-3, rtol=1e-3), (out, ref)

    print("KERNEL_OK")
</pallas_src>

<mosaic_0001>
module attributes {stable_mosaic.version = 11 : i64} {
  func.func @_lstm_kernel(%arg0: memref<16x4xbf16, #tpu.memory_space<vmem>>, %arg1: memref<4x128xbf16, #tpu.memory_space<vmem>>, %arg2: memref<32x128xbf16, #tpu.memory_space<vmem>>, %arg3: memref<1x128xf32, #tpu.memory_space<vmem>>, %arg4: memref<32x128xbf16, #tpu.memory_space<vmem>>, %arg5: memref<32x128xbf16, #tpu.memory_space<vmem>>, %arg6: memref<1x128xf32, #tpu.memory_space<vmem>>, %arg7: memref<32x16xf32, #tpu.memory_space<vmem>>, %arg8: memref<1x16xf32, #tpu.memory_space<vmem>>, %arg9: memref<16x3xf32, #tpu.memory_space<vmem>>, %arg10: memref<1x3xf32, #tpu.memory_space<vmem>>, %arg11: memref<2x3xf32, #tpu.memory_space<vmem>>) attributes {dimension_semantics = [], scalar_prefetch = 0 : i64, scratch_operands = 0 : i64, tpu.core_type = #tpu.core_type<tc>} {
    %c0 = arith.constant 0 : index
    %c0_0 = arith.constant 0 : index
    %0 = vector.load %arg2[%c0, %c0_0] : memref<32x128xbf16, #tpu.memory_space<vmem>>, vector<32x128xbf16>
    %c0_1 = arith.constant 0 : index
    %c0_2 = arith.constant 0 : index
    %1 = vector.load %arg4[%c0_1, %c0_2] : memref<32x128xbf16, #tpu.memory_space<vmem>>, vector<32x128xbf16>
    %c0_3 = arith.constant 0 : index
    %c0_4 = arith.constant 0 : index
    %2 = vector.load %arg5[%c0_3, %c0_4] : memref<32x128xbf16, #tpu.memory_space<vmem>>, vector<32x128xbf16>
    %c0_5 = arith.constant 0 : index
    %c0_6 = arith.constant 0 : index
    %3 = vector.load %arg6[%c0_5, %c0_6] : memref<1x128xf32, #tpu.memory_space<vmem>>, vector<1x128xf32>
    %cst = arith.constant 0.000000e+00 : f32
    %4 = vector.broadcast %cst : f32 to vector<2x32xf32>
    %cst_7 = arith.constant 0.000000e+00 : bf16
    %5 = vector.broadcast %cst_7 : bf16 to vector<2x32xbf16>
    %c0_8 = arith.constant 0 : index
    %c0_9 = arith.constant 0 : index
    %6 = vector.load %arg0[%c0_8, %c0_9] : memref<16x4xbf16, #tpu.memory_space<vmem>>, vector<16x4xbf16>
    %c0_10 = arith.constant 0 : index
    %c0_11 = arith.constant 0 : index
    %7 = vector.load %arg1[%c0_10, %c0_11] : memref<4x128xbf16, #tpu.memory_space<vmem>>, vector<4x128xbf16>
    %cst_12 = arith.constant dense<0.000000e+00> : vector<16x128xf32>
    %8 = tpu.matmul %6, %7, %cst_12 {dimension_numbers = #tpu.dot_dimension_numbers<[1], [0], [0], [1], [0, 0, 1, 1], [], []>} : vector<16x4xbf16>, vector<4x128xbf16>, vector<16x128xf32> -> vector<16x128xf32>
    %c0_13 = arith.constant 0 : index
    %c0_14 = arith.constant 0 : index
    %9 = vector.load %arg3[%c0_13, %c0_14] : memref<1x128xf32, #tpu.memory_space<vmem>>, vector<1x128xf32>
    %10 = vector.broadcast %9 : vector<1x128xf32> to vector<16x128xf32>
    %11 = arith.addf %8, %10 : vector<16x128xf32>
    %12 = vector.extract_strided_slice %11 {offsets = [0, 0], sizes = [2, 128], strides = [1, 1]} : vector<16x128xf32> to vector<2x128xf32>
    %13 = vector.extract_strided_slice %11 {offsets = [2, 0], sizes = [2, 128], strides = [1, 1]} : vector<16x128xf32> to vector<2x128xf32>
    %14 = vector.extract_strided_slice %11 {offsets = [4, 0], sizes = [2, 128], strides = [1, 1]} : vector<16x128xf32> to vector<2x128xf32>
    %15 = vector.extract_strided_slice %11 {offsets = [6, 0], sizes = [2, 128], strides = [1, 1]} : vector<16x128xf32> to vector<2x128xf32>
    %16 = vector.extract_strided_slice %11 {offsets = [8, 0], sizes = [2, 128], strides = [1, 1]} : vector<16x128xf32> to vector<2x128xf32>
    %17 = vector.extract_strided_slice %11 {offsets = [10, 0], sizes = [2, 128], strides = [1, 1]} : vector<16x128xf32> to vector<2x128xf32>
    %18 = vector.extract_strided_slice %11 {offsets = [12, 0], sizes = [2, 128], strides = [1, 1]} : vector<16x128xf32> to vector<2x128xf32>
    %19 = vector.extract_strided_slice %11 {offsets = [14, 0], sizes = [2, 128], strides = [1, 1]} : vector<16x128xf32> to vector<2x128xf32>
    %cst_15 = arith.constant dense<0.000000e+00> : vector<2x128xf32>
    %20 = tpu.matmul %5, %0, %cst_15 {dimension_numbers = #tpu.dot_dimension_numbers<[1], [0], [0], [1], [0, 0, 1, 1], [], []>} : vector<2x32xbf16>, vector<32x128xbf16>, vector<2x128xf32> -> vector<2x128xf32>
    %21 = arith.addf %12, %20 : vector<2x128xf32>
    %cst_16 = arith.constant 5.000000e-01 : f32
    %22 = vector.broadcast %cst_16 : f32 to vector<2x128xf32>
    %23 = arith.mulf %22, %21 : vector<2x128xf32>
    %24 = math.tanh %23 : vector<2x128xf32>
    %cst_17 = arith.constant 5.000000e-01 : f32
    %25 = vector.broadcast %cst_17 : f32 to vector<2x128xf32>
    %26 = arith.mulf %25, %24 : vector<2x128xf32>
    %cst_18 = arith.constant 5.000000e-01 : f32
    %27 = vector.broadcast %cst_18 : f32 to vector<2x128xf32>
    %28 = arith.addf %26, %27 : vector<2x128xf32>
    %29 = math.tanh %21 : vector<2x128xf32>
    %30 = vector.extract_strided_slice %28 {offsets = [0, 0], sizes = [2, 32], strides = [1, 1]} : vector<2x128xf32> to vector<2x32xf32>
    %31 = vector.extract_strided_slice %28 {offsets = [0, 32], sizes = [2, 32], strides = [1, 1]} : vector<2x128xf32> to vector<2x32xf32>
    %32 = vector.extract_strided_slice %28 {offsets = [0, 96], sizes = [2, 32], strides = [1, 1]} : vector<2x128xf32> to vector<2x32xf32>
    %33 = vector.extract_strided_slice %29 {offsets = [0, 64], sizes = [2, 32], strides = [1, 1]} : vector<2x128xf32> to vector<2x32xf32>
    %34 = arith.mulf %31, %4 : vector<2x32xf32>
    %35 = arith.mulf %30, %33 : vector<2x32xf32>
    %36 = arith.addf %34, %35 : vector<2x32xf32>
    %37 = math.tanh %36 : vector<2x32xf32>
    %38 = arith.mulf %32, %37 : vector<2x32xf32>
    %39 = arith.truncf %38 : vector<2x32xf32> to vector<2x32xbf16>
    %cst_19 = arith.constant dense<0.000000e+00> : vector<2x128xf32>
    %40 = tpu.matmul %39, %1, %cst_19 {dimension_numbers = #tpu.dot_dimension_numbers<[1], [0], [0], [1], [0, 0, 1, 1], [], []>} : vector<2x32xbf16>, vector<32x128xbf16>, vector<2x128xf32> -> vector<2x128xf32>
    %41 = vector.broadcast %3 : vector<1x128xf32> to vector<2x128xf32>
    %42 = arith.addf %40, %41 : vector<2x128xf32>
    %cst_20 = arith.constant dense<0.000000e+00> : vector<2x128xf32>
    %43 = tpu.matmul %5, %2, %cst_20 {dimension_numbers = #tpu.dot_dimension_numbers<[1], [0], [0], [1], [0, 0, 1, 1], [], []>} : vector<2x32xbf16>, vector<32x128xbf16>, vector<2x128xf32> -> vector<2x128xf32>
    %44 = arith.addf %42, %43 : vector<2x128xf32>
    %cst_21 = arith.constant 5.000000e-01 : f32
    %45 = vector.broadcast %cst_21 : f32 to vector<2x128xf32>
    %46 = arith.mulf %45, %44 : vector<2x128xf32>
    %47 = math.tanh %46 : vector<2x128xf32>
    %cst_22 = arith.constant 5.000000e-01 : f32
    %48 = vector.broadcast %cst_22 : f32 to vector<2x128xf32>
    %49 = arith.mulf %48, %47 : vector<2x128xf32>
    %cst_23 = arith.constant 5.000000e-01 : f32
    %50 = vector.broadcast %cst_23 : f32 to vector<2x128xf32>
    %51 = arith.addf %49, %50 : vector<2x128xf32>
    %52 = math.tanh %44 : vector<2x128xf32>
    %53 = vector.extract_strided_slice %51 {offsets = [0, 0], sizes = [2, 32], strides = [1, 1]} : vector<2x128xf32> to vector<2x32xf32>
    %54 = vector.extract_strided_slice %51 {offsets = [0, 32], sizes = [2, 32], strides = [1, 1]} : vector<2x128xf32> to vector<2x32xf32>
    %55 = vector.extract_strided_slice %51 {offsets = [0, 96], sizes = [2, 32], strides = [1, 1]} : vector<2x128xf32> to vector<2x32xf32>
    %56 = vector.extract_strided_slice %52 {offsets = [0, 64], sizes = [2, 32], strides = [1, 1]} : vector<2x128xf32> to vector<2x32xf32>
    %57 = arith.mulf %54, %4 : vector<2x32xf32>
    %58 = arith.mulf %53, %56 : vector<2x32xf32>
    %59 = arith.addf %57, %58 : vector<2x32xf32>
    %60 = math.tanh %59 : vector<2x32xf32>
    %61 = arith.mulf %55, %60 : vector<2x32xf32>
    %62 = arith.truncf %61 : vector<2x32xf32> to vector<2x32xbf16>
    %cst_24 = arith.constant dense<0.000000e+00> : vector<2x128xf32>
    %63 = tpu.matmul %39, %0, %cst_24 {dimension_numbers = #tpu.dot_dimension_numbers<[1], [0], [0], [1], [0, 0, 1, 1], [], []>} : vector<2x32xbf16>, vector<32x128xbf16>, vector<2x128xf32> -> vector<2x128xf32>
    %64 = arith.addf %13, %63 : vector<2x128xf32>
    %cst_25 = arith.constant 5.000000e-01 : f32
    %65 = vector.broadcast %cst_25 : f32 to vector<2x128xf32>
    %66 = arith.mulf %65, %64 : vector<2x128xf32>
    %67 = math.tanh %66 : vector<2x128xf32>
    %cst_26 = arith.constant 5.000000e-01 : f32
    %68 = vector.broadcast %cst_26 : f32 to vector<2x128xf32>
    %69 = arith.mulf %68, %67 : vector<2x128xf32>
    %cst_27 = arith.constant 5.000000e-01 : f32
    %70 = vector.broadcast %cst_27 : f32 to vector<2x128xf32>
    %71 = arith.addf %69, %70 : vector<2x128xf32>
    %72 = math.tanh %64 : vector<2x128xf32>
    %73 = vector.extract_strided_slice %71 {offsets = [0, 0], sizes = [2, 32], strides = [1, 1]} : vector<2x128xf32> to vector<2x32xf32>
    %74 = vector.extract_strided_slice %71 {offsets = [0, 32], sizes = [2, 32], strides = [1, 1]} : vector<2x128xf32> to vector<2x32xf32>
    %75 = vector.extract_strided_slice %71 {offsets = [0, 96], sizes = [2, 32], strides = [1, 1]} : vector<2x128xf32> to vector<2x32xf32>
    %76 = vector.extract_strided_slice %72 {offsets = [0, 64], sizes = [2, 32], strides = [1, 1]} : vector<2x128xf32> to vector<2x32xf32>
    %77 = arith.mulf %74, %36 : vector<2x32xf32>
    %78 = arith.mulf %73, %76 : vector<2x32xf32>
    %79 = arith.addf %77, %78 : vector<2x32xf32>
    %80 = math.tanh %79 : vector<2x32xf32>
    %81 = arith.mulf %75, %80 : vector<2x32xf32>
    %82 = arith.truncf %81 : vector<2x32xf32> to vector<2x32xbf16>
    %cst_28 = arith.constant dense<0.000000e+00> : vector<2x128xf32>
    %83 = tpu.matmul %82, %1, %cst_28 {dimension_numbers = #tpu.dot_dimension_numbers<[1], [0], [0], [1], [0, 0, 1, 1], [], []>} : vector<2x32xbf16>, vector<32x128xbf16>, vector<2x128xf32> -> vector<2x128xf32>
    %84 = vector.broadcast %3 : vector<1x128xf32> to vector<2x128xf32>
    %85 = arith.addf %83, %84 : vector<2x128xf32>
    %cst_29 = arith.constant dense<0.000000e+00> : vector<2x128xf32>
    %86 = tpu.matmul %62, %2, %cst_29 {dimension_numbers = #tpu.dot_dimension_numbers<[1], [0], [0], [1], [0, 0, 1, 1], [], []>} : vector<2x32xbf16>, vector<32x128xbf16>, vector<2x128xf32> -> vector<2x128xf32>
    %87 = arith.addf %85, %86 : vector<2x128xf32>
    %cst_30 = arith.constant 5.000000e-01 : f32
    %88 = vector.broadcast %cst_30 : f32 to vector<2x128xf32>
    %89 = arith.mulf %88, %87 : vector<2x128xf32>
    %90 = math.tanh %89 : vector<2x128xf32>
    %cst_31 = arith.constant 5.000000e-01 : f32
    %91 = vector.broadcast %cst_31 : f32 to vector<2x128xf32>
    %92 = arith.mulf %91, %90 : vector<2x128xf32>
    %cst_32 = arith.constant 5.000000e-01 : f32
    %93 = vector.broadcast %cst_32 : f32 to vector<2x128xf32>
    %94 = arith.addf %92, %93 : vector<2x128xf32>
    %95 = math.tanh %87 : vector<2x128xf32>
    %96 = vector.extract_strided_slice %94 {offsets = [0, 0], sizes = [2, 32], strides = [1, 1]} : vector<2x128xf32> to vector<2x32xf32>
    %97 = vector.extract_strided_slice %94 {offsets = [0, 32], sizes = [2, 32], strides = [1, 1]} : vector<2x128xf32> to vector<2x32xf32>
    %98 = vector.extract_strided_slice %94 {offsets = [0, 96], sizes = [2, 32], strides = [1, 1]} : vector<2x128xf32> to vector<2x32xf32>
    %99 = vector.extract_strided_slice %95 {offsets = [0, 64], sizes = [2, 32], strides = [1, 1]} : vector<2x128xf32> to vector<2x32xf32>
    %100 = arith.mulf %97, %59 : vector<2x32xf32>
    %101 = arith.mulf %96, %99 : vector<2x32xf32>
    %102 = arith.addf %100, %101 : vector<2x32xf32>
    %103 = math.tanh %102 : vector<2x32xf32>
    %104 = arith.mulf %98, %103 : vector<2x32xf32>
    %105 = arith.truncf %104 : vector<2x32xf32> to vector<2x32xbf16>
    %cst_33 = arith.constant dense<0.000000e+00> : vector<2x128xf32>
    %106 = tpu.matmul %82, %0, %cst_33 {dimension_numbers = #tpu.dot_dimension_numbers<[1], [0], [0], [1], [0, 0, 1, 1], [], []>} : vector<2x32xbf16>, vector<32x128xbf16>, vector<2x128xf32> -> vector<2x128xf32>
    %107 = arith.addf %14, %106 : vector<2x128xf32>
    %cst_34 = arith.constant 5.000000e-01 : f32
    %108 = vector.broadcast %cst_34 : f32 to vector<2x128xf32>
    %109 = arith.mulf %108, %107 : vector<2x128xf32>
    %110 = math.tanh %109 : vector<2x128xf32>
    %cst_35 = arith.constant 5.000000e-01 : f32
    %111 = vector.broadcast %cst_35 : f32 to vector<2x128xf32>
    %112 = arith.mulf %111, %110 : vector<2x128xf32>
    %cst_36 = arith.constant 5.000000e-01 : f32
    %113 = vector.broadcast %cst_36 : f32 to vector<2x128xf32>
    %114 = arith.addf %112, %113 : vector<2x128xf32>
    %115 = math.tanh %107 : vector<2x128xf32>
    %116 = vector.extract_strided_slice %114 {offsets = [0, 0], sizes = [2, 32], strides = [1, 1]} : vector<2x128xf32> to vector<2x32xf32>
    %117 = vector.extract_strided_slice %114 {offsets = [0, 32], sizes = [2, 32], strides = [1, 1]} : vector<2x128xf32> to vector<2x32xf32>
    %118 = vector.extract_strided_slice %114 {offsets = [0, 96], sizes = [2, 32], strides = [1, 1]} : vector<2x128xf32> to vector<2x32xf32>
    %119 = vector.extract_strided_slice %115 {offsets = [0, 64], sizes = [2, 32], strides = [1, 1]} : vector<2x128xf32> to vector<2x32xf32>
    %120 = arith.mulf %117, %79 : vector<2x32xf32>
    %121 = arith.mulf %116, %119 : vector<2x32xf32>
    %122 = arith.addf %120, %121 : vector<2x32xf32>
    %123 = math.tanh %122 : vector<2x32xf32>
    %124 = arith.mulf %118, %123 : vector<2x32xf32>
    %125 = arith.truncf %124 : vector<2x32xf32> to vector<2x32xbf16>
    %cst_37 = arith.constant dense<0.000000e+00> : vector<2x128xf32>
    %126 = tpu.matmul %125, %1, %cst_37 {dimension_numbers = #tpu.dot_dimension_numbers<[1], [0], [0], [1], [0, 0, 1, 1], [], []>} : vector<2x32xbf16>, vector<32x128xbf16>, vector<2x128xf32> -> vector<2x128xf32>
    %127 = vector.broadcast %3 : vector<1x128xf32> to vector<2x128xf32>
    %128 = arith.addf %126, %127 : vector<2x128xf32>
    %cst_38 = arith.constant dense<0.000000e+00> : vector<2x128xf32>
    %129 = tpu.matmul %105, %2, %cst_38 {dimension_numbers = #tpu.dot_dimension_numbers<[1], [0], [0], [1], [0, 0, 1, 1], [], []>} : vector<2x32xbf16>, vector<32x128xbf16>, vector<2x128xf32> -> vector<2x128xf32>
    %130 = arith.addf %128, %129 : vector<2x128xf32>
    %cst_39 = arith.constant 5.000000e-01 : f32
    %131 = vector.broadcast %cst_39 : f32 to vector<2x128xf32>
    %132 = arith.mulf %131, %130 : vector<2x128xf32>
    %133 = math.tanh %132 : vector<2x128xf32>
    %cst_40 = arith.constant 5.000000e-01 : f32
    %134 = vector.broadcast %cst_40 : f32 to vector<2x128xf32>
    %135 = arith.mulf %134, %133 : vector<2x128xf32>
    %cst_41 = arith.constant 5.000000e-01 : f32
    %136 = vector.broadcast %cst_41 : f32 to vector<2x128xf32>
    %137 = arith.addf %135, %136 : vector<2x128xf32>
    %138 = math.tanh %130 : vector<2x128xf32>
    %139 = vector.extract_strided_slice %137 {offsets = [0, 0], sizes = [2, 32], strides = [1, 1]} : vector<2x128xf32> to vector<2x32xf32>
    %140 = vector.extract_strided_slice %137 {offsets = [0, 32], sizes = [2, 32], strides = [1, 1]} : vector<2x128xf32> to vector<2x32xf32>
    %141 = vector.extract_strided_slice %137 {offsets = [0, 96], sizes = [2, 32], strides = [1, 1]} : vector<2x128xf32> to vector<2x32xf32>
    %142 = vector.extract_strided_slice %138 {offsets = [0, 64], sizes = [2, 32], strides = [1, 1]} : vector<2x128xf32> to vector<2x32xf32>
    %143 = arith.mulf %140, %102 : vector<2x32xf32>
    %144 = arith.mulf %139, %142 : vector<2x32xf32>
    %145 = arith.addf %143, %144 : vector<2x32xf32>
    %146 = math.tanh %145 : vector<2x32xf32>
    %147 = arith.mulf %141, %146 : vector<2x32xf32>
    %148 = arith.truncf %147 : vector<2x32xf32> to vector<2x32xbf16>
    %cst_42 = arith.constant dense<0.000000e+00> : vector<2x128xf32>
    %149 = tpu.matmul %125, %0, %cst_42 {dimension_numbers = #tpu.dot_dimension_numbers<[1], [0], [0], [1], [0, 0, 1, 1], [], []>} : vector<2x32xbf16>, vector<32x128xbf16>, vector<2x128xf32> -> vector<2x128xf32>
    %150 = arith.addf %15, %149 : vector<2x128xf32>
    %cst_43 = arith.constant 5.000000e-01 : f32
    %151 = vector.broadcast %cst_43 : f32 to vector<2x128xf32>
    %152 = arith.mulf %151, %150 : vector<2x128xf32>
    %153 = math.tanh %152 : vector<2x128xf32>
    %cst_44 = arith.constant 5.000000e-01 : f32
    %154 = vector.broadcast %cst_44 : f32 to vector<2x128xf32>
    %155 = arith.mulf %154, %153 : vector<2x128xf32>
    %cst_45 = arith.constant 5.000000e-01 : f32
    %156 = vector.broadcast %cst_45 : f32 to vector<2x128xf32>
    %157 = arith.addf %155, %156 : vector<2x128xf32>
    %158 = math.tanh %150 : vector<2x128xf32>
    %159 = vector.extract_strided_slice %157 {offsets = [0, 0], sizes = [2, 32], strides = [1, 1]} : vector<2x128xf32> to vector<2x32xf32>
    %160 = vector.extract_strided_slice %157 {offsets = [0, 32], sizes = [2, 32], strides = [1, 1]} : vector<2x128xf32> to vector<2x32xf32>
    %161 = vector.extract_strided_slice %157 {offsets = [0, 96], sizes = [2, 32], strides = [1, 1]} : vector<2x128xf32> to vector<2x32xf32>
    %162 = vector.extract_strided_slice %158 {offsets = [0, 64], sizes = [2, 32], strides = [1, 1]} : vector<2x128xf32> to vector<2x32xf32>
    %163 = arith.mulf %160, %122 : vector<2x32xf32>
    %164 = arith.mulf %159, %162 : vector<2x32xf32>
    %165 = arith.addf %163, %164 : vector<2x32xf32>
    %166 = math.tanh %165 : vector<2x32xf32>
    %167 = arith.mulf %161, %166 : vector<2x32xf32>
    %168 = arith.truncf %167 : vector<2x32xf32> to vector<2x32xbf16>
    %cst_46 = arith.constant dense<0.000000e+00> : vector<2x128xf32>
    %169 = tpu.matmul %168, %1, %cst_46 {dimension_numbers = #tpu.dot_dimension_numbers<[1], [0], [0], [1], [0, 0, 1, 1], [], []>} : vector<2x32xbf16>, vector<32x128xbf16>, vector<2x128xf32> -> vector<2x128xf32>
    %170 = vector.broadcast %3 : vector<1x128xf32> to vector<2x128xf32>
    %171 = arith.addf %169, %170 : vector<2x128xf32>
    %cst_47 = arith.constant dense<0.000000e+00> : vector<2x128xf32>
    %172 = tpu.matmul %148, %2, %cst_47 {dimension_numbers = #tpu.dot_dimension_numbers<[1], [0], [0], [1], [0, 0, 1, 1], [], []>} : vector<2x32xbf16>, vector<32x128xbf16>, vector<2x128xf32> -> vector<2x128xf32>
    %173 = arith.addf %171, %172 : vector<2x128xf32>
    %cst_48 = arith.constant 5.000000e-01 : f32
    %174 = vector.broadcast %cst_48 : f32 to vector<2x128xf32>
    %175 = arith.mulf %174, %173 : vector<2x128xf32>
    %176 = math.tanh %175 : vector<2x128xf32>
    %cst_49 = arith.constant 5.000000e-01 : f32
    %177 = vector.broadcast %cst_49 : f32 to vector<2x128xf32>
    %178 = arith.mulf %177, %176 : vector<2x128xf32>
    %cst_50 = arith.constant 5.000000e-01 : f32
    %179 = vector.broadcast %cst_50 : f32 to vector<2x128xf32>
    %180 = arith.addf %178, %179 : vector<2x128xf32>
    %181 = math.tanh %173 : vector<2x128xf32>
    %182 = vector.extract_strided_slice %180 {offsets = [0, 0], sizes = [2, 32], strides = [1, 1]} : vector<2x128xf32> to vector<2x32xf32>
    %183 = vector.extract_strided_slice %180 {offsets = [0, 32], sizes = [2, 32], strides = [1, 1]} : vector<2x128xf32> to vector<2x32xf32>
    %184 = vector.extract_strided_slice %180 {offsets = [0, 96], sizes = [2, 32], strides = [1, 1]} : vector<2x128xf32> to vector<2x32xf32>
    %185 = vector.extract_strided_slice %181 {offsets = [0, 64], sizes = [2, 32], strides = [1, 1]} : vector<2x128xf32> to vector<2x32xf32>
    %186 = arith.mulf %183, %145 : vector<2x32xf32>
    %187 = arith.mulf %182, %185 : vector<2x32xf32>
    %188 = arith.addf %186, %187 : vector<2x32xf32>
    %189 = math.tanh %188 : vector<2x32xf32>
    %190 = arith.mulf %184, %189 : vector<2x32xf32>
    %191 = arith.truncf %190 : vector<2x32xf32> to vector<2x32xbf16>
    %cst_51 = arith.constant dense<0.000000e+00> : vector<2x128xf32>
    %192 = tpu.matmul %168, %0, %cst_51 {dimension_numbers = #tpu.dot_dimension_numbers<[1], [0], [0], [1], [0, 0, 1, 1], [], []>} : vector<2x32xbf16>, vector<32x128xbf16>, vector<2x128xf32> -> vector<2x128xf32>
    %193 = arith.addf %16, %192 : vector<2x128xf32>
    %cst_52 = arith.constant 5.000000e-01 : f32
    %194 = vector.broadcast %cst_52 : f32 to vector<2x128xf32>
    %195 = arith.mulf %194, %193 : vector<2x128xf32>
    %196 = math.tanh %195 : vector<2x128xf32>
    %cst_53 = arith.constant 5.000000e-01 : f32
    %197 = vector.broadcast %cst_53 : f32 to vector<2x128xf32>
    %198 = arith.mulf %197, %196 : vector<2x128xf32>
    %cst_54 = arith.constant 5.000000e-01 : f32
    %199 = vector.broadcast %cst_54 : f32 to vector<2x128xf32>
    %200 = arith.addf %198, %199 : vector<2x128xf32>
    %201 = math.tanh %193 : vector<2x128xf32>
    %202 = vector.extract_strided_slice %200 {offsets = [0, 0], sizes = [2, 32], strides = [1, 1]} : vector<2x128xf32> to vector<2x32xf32>
    %203 = vector.extract_strided_slice %200 {offsets = [0, 32], sizes = [2, 32], strides = [1, 1]} : vector<2x128xf32> to vector<2x32xf32>
    %204 = vector.extract_strided_slice %200 {offsets = [0, 96], sizes = [2, 32], strides = [1, 1]} : vector<2x128xf32> to vector<2x32xf32>
    %205 = vector.extract_strided_slice %201 {offsets = [0, 64], sizes = [2, 32], strides = [1, 1]} : vector<2x128xf32> to vector<2x32xf32>
    %206 = arith.mulf %203, %165 : vector<2x32xf32>
    %207 = arith.mulf %202, %205 : vector<2x32xf32>
    %208 = arith.addf %206, %207 : vector<2x32xf32>
    %209 = math.tanh %208 : vector<2x32xf32>
    %210 = arith.mulf %204, %209 : vector<2x32xf32>
    %211 = arith.truncf %210 : vector<2x32xf32> to vector<2x32xbf16>
    %cst_55 = arith.constant dense<0.000000e+00> : vector<2x128xf32>
    %212 = tpu.matmul %211, %1, %cst_55 {dimension_numbers = #tpu.dot_dimension_numbers<[1], [0], [0], [1], [0, 0, 1, 1], [], []>} : vector<2x32xbf16>, vector<32x128xbf16>, vector<2x128xf32> -> vector<2x128xf32>
    %213 = vector.broadcast %3 : vector<1x128xf32> to vector<2x128xf32>
    %214 = arith.addf %212, %213 : vector<2x128xf32>
    %cst_56 = arith.constant dense<0.000000e+00> : vector<2x128xf32>
    %215 = tpu.matmul %191, %2, %cst_56 {dimension_numbers = #tpu.dot_dimension_numbers<[1], [0], [0], [1], [0, 0, 1, 1], [], []>} : vector<2x32xbf16>, vector<32x128xbf16>, vector<2x128xf32> -> vector<2x128xf32>
    %216 = arith.addf %214, %215 : vector<2x128xf32>
    %cst_57 = arith.constant 5.000000e-01 : f32
    %217 = vector.broadcast %cst_57 : f32 to vector<2x128xf32>
    %218 = arith.mulf %217, %216 : vector<2x128xf32>
    %219 = math.tanh %218 : vector<2x128xf32>
    %cst_58 = arith.constant 5.000000e-01 : f32
    %220 = vector.broadcast %cst_58 : f32 to vector<2x128xf32>
    %221 = arith.mulf %220, %219 : vector<2x128xf32>
    %cst_59 = arith.constant 5.000000e-01 : f32
    %222 = vector.broadcast %cst_59 : f32 to vector<2x128xf32>
    %223 = arith.addf %221, %222 : vector<2x128xf32>
    %224 = math.tanh %216 : vector<2x128xf32>
    %225 = vector.extract_strided_slice %223 {offsets = [0, 0], sizes = [2, 32], strides = [1, 1]} : vector<2x128xf32> to vector<2x32xf32>
    %226 = vector.extract_strided_slice %223 {offsets = [0, 32], sizes = [2, 32], strides = [1, 1]} : vector<2x128xf32> to vector<2x32xf32>
    %227 = vector.extract_strided_slice %223 {offsets = [0, 96], sizes = [2, 32], strides = [1, 1]} : vector<2x128xf32> to vector<2x32xf32>
    %228 = vector.extract_strided_slice %224 {offsets = [0, 64], sizes = [2, 32], strides = [1, 1]} : vector<2x128xf32> to vector<2x32xf32>
    %229 = arith.mulf %226, %188 : vector<2x32xf32>
    %230 = arith.mulf %225, %228 : vector<2x32xf32>
    %231 = arith.addf %229, %230 : vector<2x32xf32>
    %232 = math.tanh %231 : vector<2x32xf32>
    %233 = arith.mulf %227, %232 : vector<2x32xf32>
    %234 = arith.truncf %233 : vector<2x32xf32> to vector<2x32xbf16>
    %cst_60 = arith.constant dense<0.000000e+00> : vector<2x128xf32>
    %235 = tpu.matmul %211, %0, %cst_60 {dimension_numbers = #tpu.dot_dimension_numbers<[1], [0], [0], [1], [0, 0, 1, 1], [], []>} : vector<2x32xbf16>, vector<32x128xbf16>, vector<2x128xf32> -> vector<2x128xf32>
    %236 = arith.addf %17, %235 : vector<2x128xf32>
    %cst_61 = arith.constant 5.000000e-01 : f32
    %237 = vector.broadcast %cst_61 : f32 to vector<2x128xf32>
    %238 = arith.mulf %237, %236 : vector<2x128xf32>
    %239 = math.tanh %238 : vector<2x128xf32>
    %cst_62 = arith.constant 5.000000e-01 : f32
    %240 = vector.broadcast %cst_62 : f32 to vector<2x128xf32>
    %241 = arith.mulf %240, %239 : vector<2x128xf32>
    %cst_63 = arith.constant 5.000000e-01 : f32
    %242 = vector.broadcast %cst_63 : f32 to vector<2x128xf32>
    %243 = arith.addf %241, %242 : vector<2x128xf32>
    %244 = math.tanh %236 : vector<2x128xf32>
    %245 = vector.extract_strided_slice %243 {offsets = [0, 0], sizes = [2, 32], strides = [1, 1]} : vector<2x128xf32> to vector<2x32xf32>
    %246 = vector.extract_strided_slice %243 {offsets = [0, 32], sizes = [2, 32], strides = [1, 1]} : vector<2x128xf32> to vector<2x32xf32>
    %247 = vector.extract_strided_slice %243 {offsets = [0, 96], sizes = [2, 32], strides = [1, 1]} : vector<2x128xf32> to vector<2x32xf32>
    %248 = vector.extract_strided_slice %244 {offsets = [0, 64], sizes = [2, 32], strides = [1, 1]} : vector<2x128xf32> to vector<2x32xf32>
    %249 = arith.mulf %246, %208 : vector<2x32xf32>
    %250 = arith.mulf %245, %248 : vector<2x32xf32>
    %251 = arith.addf %249, %250 : vector<2x32xf32>
    %252 = math.tanh %251 : vector<2x32xf32>
    %253 = arith.mulf %247, %252 : vector<2x32xf32>
    %254 = arith.truncf %253 : vector<2x32xf32> to vector<2x32xbf16>
    %cst_64 = arith.constant dense<0.000000e+00> : vector<2x128xf32>
    %255 = tpu.matmul %254, %1, %cst_64 {dimension_numbers = #tpu.dot_dimension_numbers<[1], [0], [0], [1], [0, 0, 1, 1], [], []>} : vector<2x32xbf16>, vector<32x128xbf16>, vector<2x128xf32> -> vector<2x128xf32>
    %256 = vector.broadcast %3 : vector<1x128xf32> to vector<2x128xf32>
    %257 = arith.addf %255, %256 : vector<2x128xf32>
    %cst_65 = arith.constant dense<0.000000e+00> : vector<2x128xf32>
    %258 = tpu.matmul %234, %2, %cst_65 {dimension_numbers = #tpu.dot_dimension_numbers<[1], [0], [0], [1], [0, 0, 1, 1], [], []>} : vector<2x32xbf16>, vector<32x128xbf16>, vector<2x128xf32> -> vector<2x128xf32>
    %259 = arith.addf %257, %258 : vector<2x128xf32>
    %cst_66 = arith.constant 5.000000e-01 : f32
    %260 = vector.broadcast %cst_66 : f32 to vector<2x128xf32>
    %261 = arith.mulf %260, %259 : vector<2x128xf32>
    %262 = math.tanh %261 : vector<2x128xf32>
    %cst_67 = arith.constant 5.000000e-01 : f32
    %263 = vector.broadcast %cst_67 : f32 to vector<2x128xf32>
    %264 = arith.mulf %263, %262 : vector<2x128xf32>
    %cst_68 = arith.constant 5.000000e-01 : f32
    %265 = vector.broadcast %cst_68 : f32 to vector<2x128xf32>
    %266 = arith.addf %264, %265 : vector<2x128xf32>
    %267 = math.tanh %259 : vector<2x128xf32>
    %268 = vector.extract_strided_slice %266 {offsets = [0, 0], sizes = [2, 32], strides = [1, 1]} : vector<2x128xf32> to vector<2x32xf32>
    %269 = vector.extract_strided_slice %266 {offsets = [0, 32], sizes = [2, 32], strides = [1, 1]} : vector<2x128xf32> to vector<2x32xf32>
    %270 = vector.extract_strided_slice %266 {offsets = [0, 96], sizes = [2, 32], strides = [1, 1]} : vector<2x128xf32> to vector<2x32xf32>
    %271 = vector.extract_strided_slice %267 {offsets = [0, 64], sizes = [2, 32], strides = [1, 1]} : vector<2x128xf32> to vector<2x32xf32>
    %272 = arith.mulf %269, %231 : vector<2x32xf32>
    %273 = arith.mulf %268, %271 : vector<2x32xf32>
    %274 = arith.addf %272, %273 : vector<2x32xf32>
    %275 = math.tanh %274 : vector<2x32xf32>
    %276 = arith.mulf %270, %275 : vector<2x32xf32>
    %277 = arith.truncf %276 : vector<2x32xf32> to vector<2x32xbf16>
    %cst_69 = arith.constant dense<0.000000e+00> : vector<2x128xf32>
    %278 = tpu.matmul %254, %0, %cst_69 {dimension_numbers = #tpu.dot_dimension_numbers<[1], [0], [0], [1], [0, 0, 1, 1], [], []>} : vector<2x32xbf16>, vector<32x128xbf16>, vector<2x128xf32> -> vector<2x128xf32>
    %279 = arith.addf %18, %278 : vector<2x128xf32>
    %cst_70 = arith.constant 5.000000e-01 : f32
    %280 = vector.broadcast %cst_70 : f32 to vector<2x128xf32>
    %281 = arith.mulf %280, %279 : vector<2x128xf32>
    %282 = math.tanh %281 : vector<2x128xf32>
    %cst_71 = arith.constant 5.000000e-01 : f32
    %283 = vector.broadcast %cst_71 : f32 to vector<2x128xf32>
    %284 = arith.mulf %283, %282 : vector<2x128xf32>
    %cst_72 = arith.constant 5.000000e-01 : f32
    %285 = vector.broadcast %cst_72 : f32 to vector<2x128xf32>
    %286 = arith.addf %284, %285 : vector<2x128xf32>
    %287 = math.tanh %279 : vector<2x128xf32>
    %288 = vector.extract_strided_slice %286 {offsets = [0, 0], sizes = [2, 32], strides = [1, 1]} : vector<2x128xf32> to vector<2x32xf32>
    %289 = vector.extract_strided_slice %286 {offsets = [0, 32], sizes = [2, 32], strides = [1, 1]} : vector<2x128xf32> to vector<2x32xf32>
    %290 = vector.extract_strided_slice %286 {offsets = [0, 96], sizes = [2, 32], strides = [1, 1]} : vector<2x128xf32> to vector<2x32xf32>
    %291 = vector.extract_strided_slice %287 {offsets = [0, 64], sizes = [2, 32], strides = [1, 1]} : vector<2x128xf32> to vector<2x32xf32>
    %292 = arith.mulf %289, %251 : vector<2x32xf32>
    %293 = arith.mulf %288, %291 : vector<2x32xf32>
    %294 = arith.addf %292, %293 : vector<2x32xf32>
    %295 = math.tanh %294 : vector<2x32xf32>
    %296 = arith.mulf %290, %295 : vector<2x32xf32>
    %297 = arith.truncf %296 : vector<2x32xf32> to vector<2x32xbf16>
    %cst_73 = arith.constant dense<0.000000e+00> : vector<2x128xf32>
    %298 = tpu.matmul %297, %1, %cst_73 {dimension_numbers = #tpu.dot_dimension_numbers<[1], [0], [0], [1], [0, 0, 1, 1], [], []>} : vector<2x32xbf16>, vector<32x128xbf16>, vector<2x128xf32> -> vector<2x128xf32>
    %299 = vector.broadcast %3 : vector<1x128xf32> to vector<2x128xf32>
    %300 = arith.addf %298, %299 : vector<2x128xf32>
    %cst_74 = arith.constant dense<0.000000e+00> : vector<2x128xf32>
    %301 = tpu.matmul %277, %2, %cst_74 {dimension_numbers = #tpu.dot_dimension_numbers<[1], [0], [0], [1], [0, 0, 1, 1], [], []>} : vector<2x32xbf16>, vector<32x128xbf16>, vector<2x128xf32> -> vector<2x128xf32>
    %302 = arith.addf %300, %301 : vector<2x128xf32>
    %cst_75 = arith.constant 5.000000e-01 : f32
    %303 = vector.broadcast %cst_75 : f32 to vector<2x128xf32>
    %304 = arith.mulf %303, %302 : vector<2x128xf32>
    %305 = math.tanh %304 : vector<2x128xf32>
    %cst_76 = arith.constant 5.000000e-01 : f32
    %306 = vector.broadcast %cst_76 : f32 to vector<2x128xf32>
    %307 = arith.mulf %306, %305 : vector<2x128xf32>
    %cst_77 = arith.constant 5.000000e-01 : f32
    %308 = vector.broadcast %cst_77 : f32 to vector<2x128xf32>
    %309 = arith.addf %307, %308 : vector<2x128xf32>
    %310 = math.tanh %302 : vector<2x128xf32>
    %311 = vector.extract_strided_slice %309 {offsets = [0, 0], sizes = [2, 32], strides = [1, 1]} : vector<2x128xf32> to vector<2x32xf32>
    %312 = vector.extract_strided_slice %309 {offsets = [0, 32], sizes = [2, 32], strides = [1, 1]} : vector<2x128xf32> to vector<2x32xf32>
    %313 = vector.extract_strided_slice %309 {offsets = [0, 96], sizes = [2, 32], strides = [1, 1]} : vector<2x128xf32> to vector<2x32xf32>
    %314 = vector.extract_strided_slice %310 {offsets = [0, 64], sizes = [2, 32], strides = [1, 1]} : vector<2x128xf32> to vector<2x32xf32>
    %315 = arith.mulf %312, %274 : vector<2x32xf32>
    %316 = arith.mulf %311, %314 : vector<2x32xf32>
    %317 = arith.addf %315, %316 : vector<2x32xf32>
    %318 = math.tanh %317 : vector<2x32xf32>
    %319 = arith.mulf %313, %318 : vector<2x32xf32>
    %320 = arith.truncf %319 : vector<2x32xf32> to vector<2x32xbf16>
    %cst_78 = arith.constant dense<0.000000e+00> : vector<2x128xf32>
    %321 = tpu.matmul %297, %0, %cst_78 {dimension_numbers = #tpu.dot_dimension_numbers<[1], [0], [0], [1], [0, 0, 1, 1], [], []>} : vector<2x32xbf16>, vector<32x128xbf16>, vector<2x128xf32> -> vector<2x128xf32>
    %322 = arith.addf %19, %321 : vector<2x128xf32>
    %cst_79 = arith.constant 5.000000e-01 : f32
    %323 = vector.broadcast %cst_79 : f32 to vector<2x128xf32>
    %324 = arith.mulf %323, %322 : vector<2x128xf32>
    %325 = math.tanh %324 : vector<2x128xf32>
    %cst_80 = arith.constant 5.000000e-01 : f32
    %326 = vector.broadcast %cst_80 : f32 to vector<2x128xf32>
    %327 = arith.mulf %326, %325 : vector<2x128xf32>
    %cst_81 = arith.constant 5.000000e-01 : f32
    %328 = vector.broadcast %cst_81 : f32 to vector<2x128xf32>
    %329 = arith.addf %327, %328 : vector<2x128xf32>
    %330 = math.tanh %322 : vector<2x128xf32>
    %331 = vector.extract_strided_slice %329 {offsets = [0, 0], sizes = [2, 32], strides = [1, 1]} : vector<2x128xf32> to vector<2x32xf32>
    %332 = vector.extract_strided_slice %329 {offsets = [0, 32], sizes = [2, 32], strides = [1, 1]} : vector<2x128xf32> to vector<2x32xf32>
    %333 = vector.extract_strided_slice %329 {offsets = [0, 96], sizes = [2, 32], strides = [1, 1]} : vector<2x128xf32> to vector<2x32xf32>
    %334 = vector.extract_strided_slice %330 {offsets = [0, 64], sizes = [2, 32], strides = [1, 1]} : vector<2x128xf32> to vector<2x32xf32>
    %335 = arith.mulf %332, %294 : vector<2x32xf32>
    %336 = arith.mulf %331, %334 : vector<2x32xf32>
    %337 = arith.addf %335, %336 : vector<2x32xf32>
    %338 = math.tanh %337 : vector<2x32xf32>
    %339 = arith.mulf %333, %338 : vector<2x32xf32>
    %340 = arith.truncf %339 : vector<2x32xf32> to vector<2x32xbf16>
    %cst_82 = arith.constant dense<0.000000e+00> : vector<2x128xf32>
    %341 = tpu.matmul %340, %1, %cst_82 {dimension_numbers = #tpu.dot_dimension_numbers<[1], [0], [0], [1], [0, 0, 1, 1], [], []>} : vector<2x32xbf16>, vector<32x128xbf16>, vector<2x128xf32> -> vector<2x128xf32>
    %342 = vector.broadcast %3 : vector<1x128xf32> to vector<2x128xf32>
    %343 = arith.addf %341, %342 : vector<2x128xf32>
    %cst_83 = arith.constant dense<0.000000e+00> : vector<2x128xf32>
    %344 = tpu.matmul %320, %2, %cst_83 {dimension_numbers = #tpu.dot_dimension_numbers<[1], [0], [0], [1], [0, 0, 1, 1], [], []>} : vector<2x32xbf16>, vector<32x128xbf16>, vector<2x128xf32> -> vector<2x128xf32>
    %345 = arith.addf %343, %344 : vector<2x128xf32>
    %cst_84 = arith.constant 5.000000e-01 : f32
    %346 = vector.broadcast %cst_84 : f32 to vector<2x128xf32>
    %347 = arith.mulf %346, %345 : vector<2x128xf32>
    %348 = math.tanh %347 : vector<2x128xf32>
    %cst_85 = arith.constant 5.000000e-01 : f32
    %349 = vector.broadcast %cst_85 : f32 to vector<2x128xf32>
    %350 = arith.mulf %349, %348 : vector<2x128xf32>
    %cst_86 = arith.constant 5.000000e-01 : f32
    %351 = vector.broadcast %cst_86 : f32 to vector<2x128xf32>
    %352 = arith.addf %350, %351 : vector<2x128xf32>
    %353 = math.tanh %345 : vector<2x128xf32>
    %354 = vector.extract_strided_slice %352 {offsets = [0, 0], sizes = [2, 32], strides = [1, 1]} : vector<2x128xf32> to vector<2x32xf32>
    %355 = vector.extract_strided_slice %352 {offsets = [0, 32], sizes = [2, 32], strides = [1, 1]} : vector<2x128xf32> to vector<2x32xf32>
    %356 = vector.extract_strided_slice %352 {offsets = [0, 96], sizes = [2, 32], strides = [1, 1]} : vector<2x128xf32> to vector<2x32xf32>
    %357 = vector.extract_strided_slice %353 {offsets = [0, 64], sizes = [2, 32], strides = [1, 1]} : vector<2x128xf32> to vector<2x32xf32>
    %358 = arith.mulf %355, %317 : vector<2x32xf32>
    %359 = arith.mulf %354, %357 : vector<2x32xf32>
    %360 = arith.addf %358, %359 : vector<2x32xf32>
    %361 = math.tanh %360 : vector<2x32xf32>
    %362 = arith.mulf %356, %361 : vector<2x32xf32>
    %c0_87 = arith.constant 0 : index
    %c0_88 = arith.constant 0 : index
    %363 = vector.load %arg7[%c0_87, %c0_88] : memref<32x16xf32, #tpu.memory_space<vmem>>, vector<32x16xf32>
    %cst_89 = arith.constant dense<0.000000e+00> : vector<2x16xf32>
    %364 = tpu.matmul %362, %363, %cst_89 {dimension_numbers = #tpu.dot_dimension_numbers<[1], [0], [0], [1], [0, 0, 1, 1], [], []>} : vector<2x32xf32>, vector<32x16xf32>, vector<2x16xf32> -> vector<2x16xf32>
    %c0_90 = arith.constant 0 : index
    %c0_91 = arith.constant 0 : index
    %365 = vector.load %arg8[%c0_90, %c0_91] : memref<1x16xf32, #tpu.memory_space<vmem>>, vector<1x16xf32>
    %366 = vector.broadcast %365 : vector<1x16xf32> to vector<2x16xf32>
    %367 = arith.addf %364, %366 : vector<2x16xf32>
    %cst_92 = arith.constant 0.000000e+00 : f32
    %368 = vector.broadcast %cst_92 : f32 to vector<2x16xf32>
    %369 = arith.maximumf %367, %368 : vector<2x16xf32>
    %c0_93 = arith.constant 0 : index
    %c0_94 = arith.constant 0 : index
    %370 = vector.load %arg9[%c0_93, %c0_94] : memref<16x3xf32, #tpu.memory_space<vmem>>, vector<16x3xf32>
    %cst_95 = arith.constant dense<0.000000e+00> : vector<2x3xf32>
    %371 = tpu.matmul %369, %370, %cst_95 {dimension_numbers = #tpu.dot_dimension_numbers<[1], [0], [0], [1], [0, 0, 1, 1], [], []>} : vector<2x16xf32>, vector<16x3xf32>, vector<2x3xf32> -> vector<2x3xf32>
    %c0_96 = arith.constant 0 : index
    %c0_97 = arith.constant 0 : index
    %372 = vector.load %arg10[%c0_96, %c0_97] : memref<1x3xf32, #tpu.memory_space<vmem>>, vector<1x3xf32>
    %373 = vector.broadcast %372 : vector<1x3xf32> to vector<2x3xf32>
    %374 = arith.addf %371, %373 : vector<2x3xf32>
    %c0_98 = arith.constant 0 : index
    %c0_99 = arith.constant 0 : index
    %375 = vector.load %arg11[%c0_98, %c0_99] : memref<2x3xf32, #tpu.memory_space<vmem>>, vector<2x3xf32>
    tpu.vector_store %arg11[%c0_98, %c0_99], %374 {strides = array<i32>} : memref<2x3xf32, #tpu.memory_space<vmem>>, vector<2x3xf32>,
    return
  }
}

</mosaic_0001>

<llo_original>
// kernel: tpu_custom_call.1
$region0: #{tpu_custom_call.1}
  #allocation0 [shape = 'u32[]', space=smem, size = 0x4, offset = 0x4, fixed_abs, tag = 'smem constant byte address 0x4 - core index']
  #allocation1 [shape = 'u32[144,128]{1,0:T(1,128)}', space=vmem, size = 0x12000, scoped, tag = 'internal scratch']
  %s0 = inlined_call_operand.vmem [shape: bf16[16,4], index: 0, kind: input, shape index: {}]
  %s1 = inlined_call_operand.vmem [shape: bf16[4,128], index: 1, kind: input, shape index: {}]
  %s2 = inlined_call_operand.vmem [shape: bf16[32,128], index: 2, kind: input, shape index: {}]
  %s3 = inlined_call_operand.vmem [shape: f32[1,128], index: 3, kind: input, shape index: {}]
  %s4 = inlined_call_operand.vmem [shape: bf16[32,128], index: 4, kind: input, shape index: {}]
  %s5 = inlined_call_operand.vmem [shape: bf16[32,128], index: 5, kind: input, shape index: {}]
  %s6 = inlined_call_operand.vmem [shape: f32[1,128], index: 6, kind: input, shape index: {}]
  %s7 = inlined_call_operand.vmem [shape: f32[32,16], index: 7, kind: input, shape index: {}]
  %s8 = inlined_call_operand.vmem [shape: f32[1,16], index: 8, kind: input, shape index: {}]
  %s9 = inlined_call_operand.vmem [shape: f32[16,3], index: 9, kind: input, shape index: {}]
  %s10 = inlined_call_operand.vmem [shape: f32[1,3], index: 10, kind: input, shape index: {}]
  %s11 = inlined_call_operand.hbm [shape: f32[2,3], index: 11, kind: output, shape index: {}]
  %s12 = sld [smem:[#allocation0]]
  $region54: #{tpu_custom_call.1} parent=0
    _
  %s14 = ssub.s32 1, %s12
  %s15 = scalar_select 0, %s14, %s12
  $region1: #{tpu_custom_call.1} parent=0
    #allocation2 [shape = 'u8[1024]{0}', space=vmem, size = 0x400, scoped, tag = 'output window, operand 0, single buffered']
    #allocation3 [shape = 's32[1]{0}', space=sflag, size = 0x4, scoped, tag = 'scoped memory for tpu_custom_call.1']
    %16 = vsyncpa [#allocation3], 0
    // Predicated region
    $region2: #{tpu_custom_call.1} parent=1 // pred_check
      _
    $region3: #{tpu_custom_call.1} parent=1 // pred_check_branch
      %18 = sbr.rel (0) target = $region5
    $region4: #{tpu_custom_call.1} parent=1 // pred_region
      _
    $region5: #{tpu_custom_call.1} parent=1 // pred_fallthru
      _
    // Predicated region
    $region6: #{tpu_custom_call.1} parent=1 // pred_check
      _
    $region7: #{tpu_custom_call.1} parent=1 // pred_check_branch
      %20 = sbr.rel (0) target = $region9
    $region8: #{tpu_custom_call.1} parent=1 // pred_region
      _
    $region9: #{tpu_custom_call.1} parent=1 // pred_fallthru
      _
    // Predicated region
    $region10: #{tpu_custom_call.1} parent=1 // pred_check
      _
    $region11: #{tpu_custom_call.1} parent=1 // pred_check_branch
      %22 = sbr.rel (0) target = $region13
    $region12: #{tpu_custom_call.1} parent=1 // pred_region
      _
    $region13: #{tpu_custom_call.1} parent=1 // pred_fallthru
      _
    // Predicated region
    $region14: #{tpu_custom_call.1} parent=1 // pred_check
      _
    $region15: #{tpu_custom_call.1} parent=1 // pred_check_branch
      %24 = sbr.rel (0) target = $region17
    $region16: #{tpu_custom_call.1} parent=1 // pred_region
      _
    $region17: #{tpu_custom_call.1} parent=1 // pred_fallthru
      _
    // Predicated region
    $region18: #{tpu_custom_call.1} parent=1 // pred_check
      _
    $region19: #{tpu_custom_call.1} parent=1 // pred_check_branch
      %26 = sbr.rel (0) target = $region21
    $region20: #{tpu_custom_call.1} parent=1 // pred_region
      _
    $region21: #{tpu_custom_call.1} parent=1 // pred_fallthru
      _
    // Predicated region
    $region22: #{tpu_custom_call.1} parent=1 // pred_check
      _
    $region23: #{tpu_custom_call.1} parent=1 // pred_check_branch
      %28 = sbr.rel (0) target = $region25
    $region24: #{tpu_custom_call.1} parent=1 // pred_region
      _
    $region25: #{tpu_custom_call.1} parent=1 // pred_fallthru
      _
    // Predicated region
    $region26: #{tpu_custom_call.1} parent=1 // pred_check
      _
    $region27: #{tpu_custom_call.1} parent=1 // pred_check_branch
      %30 = sbr.rel (0) target = $region29
    $region28: #{tpu_custom_call.1} parent=1 // pred_region
      _
    $region29: #{tpu_custom_call.1} parent=1 // pred_fallthru
      _
    // Predicated region
    $region30: #{tpu_custom_call.1} parent=1 // pred_check
      _
    $region31: #{tpu_custom_call.1} parent=1 // pred_check_branch
      %32 = sbr.rel (0) target = $region33
    $region32: #{tpu_custom_call.1} parent=1 // pred_region
      _
    $region33: #{tpu_custom_call.1} parent=1 // pred_fallthru
      _
    // Predicated region
    $region34: #{tpu_custom_call.1} parent=1 // pred_check
      _
    $region35: #{tpu_custom_call.1} parent=1 // pred_check_branch
      %34 = sbr.rel (0) target = $region37
    $region36: #{tpu_custom_call.1} parent=1 // pred_region
      _
    $region37: #{tpu_custom_call.1} parent=1 // pred_fallthru
      _
    // Predicated region
    $region38: #{tpu_custom_call.1} parent=1 // pred_check
      _
    $region39: #{tpu_custom_call.1} parent=1 // pred_check_branch
      %36 = sbr.rel (0) target = $region41
    $region40: #{tpu_custom_call.1} parent=1 // pred_region
      _
    $region41: #{tpu_custom_call.1} parent=1 // pred_fallthru
      _
    // Predicated region
    $region42: #{tpu_custom_call.1} parent=1 // pred_check
      _
    $region43: #{tpu_custom_call.1} parent=1 // pred_check_branch
      %38 = sbr.rel (0) target = $region45
    $region44: #{tpu_custom_call.1} parent=1 // pred_region
      _
    $region45: #{tpu_custom_call.1} parent=1 // pred_fallthru
      _
    %v40 = vld [vmem:[%s2] sm:$0xf]
    %v41 = vld [vmem:[%s2 + $0x4] sm:$0xf]
    %v42 = vld [vmem:[%s2 + $0x8] sm:$0xf]
    %v43 = vld [vmem:[%s2 + $0xc] sm:$0xf]
    %v44 = vld [vmem:[%s4] sm:$0xf]
    %v45 = vld [vmem:[%s4 + $0x4] sm:$0xf]
    %v46 = vld [vmem:[%s4 + $0x8] sm:$0xf]
    %v47 = vld [vmem:[%s4 + $0xc] sm:$0xf]
    %v48 = vld [vmem:[%s5] sm:$0xf]
    %v49 = vld [vmem:[%s5 + $0x4] sm:$0xf]
    %v50 = vld [vmem:[%s5 + $0x8] sm:$0xf]
    %v51 = vld [vmem:[%s5 + $0xc] sm:$0xf]
    %v52 = vld [vmem:[%s6] sm:$0x1]
    %v53 = vld [vmem:[%s0] sm:$0xf]
    %v54 = vld [vmem:[%s0 + $0x4] sm:$0xf]
    %v55 = vld [vmem:[%s1] sm:$0x3]
    %v56 = vld [vmem:[%s3] sm:$0x1]
    %v58 = vlaneseq
    %v59 = vshrl.u32 %v58, 7
    %v60 = vsub.s32 0, %v59
    %v61 = vrot.slane %v56, %v60
    %v65 = vunpack.c.l.b16 %v53
    %v66 = vunpack.c.l.b16 %v54
    %v67 = vpack.c.b16 %v66, %v65
    %vm68 = vcmask 31744
    %v70 = vsel %vm68, %v67, 0
    %vm72 = vcmask 1041408
    %v74 = vsel %vm72, %v55, 0
    %76 = vmatprep.subr.bf16.mxu0 0
    %77 = vmatpush1.bf16.msra.mxu0 %v74
    %78 = vmatprep.subr.bf16.mxu0 0
    %79 = vmatpush1.bf16.msra.mxu0 0
    %80 = vmatprep.subr.bf16.mxu0 0
    %81 = vmatpush1.bf16.msra.mxu0 0
    %82 = vmatprep.subr.bf16.mxu0 0
    %83 = vmatpush1.bf16.msra.mxu0 0
    %84 = vmatprep.subr.bf16.mxu0 0
    %85 = vmatpush1.bf16.msra.mxu0 0
    %86 = vmatprep.subr.bf16.mxu0 0
    %87 = vmatpush1.bf16.msra.mxu0 0
    %88 = vmatprep.subr.bf16.mxu0 0
    %89 = vmatpush1.bf16.msra.mxu0 0
    %90 = vmatprep.subr.bf16.mxu0 0
    %91 = vmatpush1.bf16.msra.mxu0 0
    %92 = vmatprep.subr.bf16.mxu0 0
    %93 = vmatpush1.bf16.msra.mxu0 0
    %94 = vmatprep.subr.bf16.mxu0 0
    %95 = vmatpush1.bf16.msra.mxu0 0
    %96 = vmatprep.subr.bf16.mxu0 0
    %97 = vmatpush1.bf16.msra.mxu0 0
    %98 = vmatprep.subr.bf16.mxu0 0
    %99 = vmatpush1.bf16.msra.mxu0 0
    %100 = vmatprep.subr.bf16.mxu0 0
    %101 = vmatpush1.bf16.msra.mxu0 0
    %102 = vmatprep.subr.bf16.mxu0 0
    %103 = vmatpush1.bf16.msra.mxu0 0
    %104 = vmatprep.subr.bf16.mxu0 0
    %105 = vmatpush1.bf16.msra.mxu0 0
    %106 = vmatprep.subr.bf16.mxu0 0
    %107 = vmatpush1.bf16.msra.mxu0 0
    %108 = vmatprep.mubr.bf16.mxu0 0
    %109 = vmatmul.mubr.bf16.gmra.mrb[0].mxu0 %v70
    %v110 = vpop.f32.mrb[0].mxu0
    %v111 = vadd.f32 %v61, %v110
    %v112 = vpop.f32.mrb[0].mxu0
    %v113 = vpop.f32.mrb[0].mxu0
    %v114 = vadd.f32 %v61, %v113
    %v115 = vpop.f32.mrb[0].mxu0
    %116 = vdwg.mxu0
    %v121 = vunpack.c.l.b16 %v40
    %v122 = vunpack.c.l.b16 %v41
    %v123 = vunpack.c.l.b16 %v42
    %v124 = vunpack.c.l.b16 %v43
    %v125 = vpack.c.b16 %v122, %v121
    %v126 = vpack.c.b16 %v124, %v123
    %vm129 = vcmask 261120
    %v131 = vsel %vm129, 0, 0
    %133 = vmatprep.subr.bf16.mxu0 0
    %134 = vmatpush1.bf16.msra.mxu0 %v125
    %135 = vmatprep.subr.bf16.mxu0 0
    %136 = vmatpush1.bf16.msra.mxu0 %v126
    %137 = vmatprep.subr.bf16.mxu0 0
    %138 = vmatpush1.bf16.msra.mxu0 0
    %139 = vmatprep.subr.bf16.mxu0 0
    %140 = vmatpush1.bf16.msra.mxu0 0
    %141 = vmatprep.subr.bf16.mxu0 0
    %142 = vmatpush1.bf16.msra.mxu0 0
    %143 = vmatprep.subr.bf16.mxu0 0
    %144 = vmatpush1.bf16.msra.mxu0 0
    %145 = vmatprep.subr.bf16.mxu0 0
    %146 = vmatpush1.bf16.msra.mxu0 0
    %147 = vmatprep.subr.bf16.mxu0 0
    %148 = vmatpush1.bf16.msra.mxu0 0
    %149 = vmatprep.subr.bf16.mxu0 0
    %150 = vmatpush1.bf16.msra.mxu0 0
    %151 = vmatprep.subr.bf16.mxu0 0
    %152 = vmatpush1.bf16.msra.mxu0 0
    %153 = vmatprep.subr.bf16.mxu0 0
    %154 = vmatpush1.bf16.msra.mxu0 0
    %155 = vmatprep.subr.bf16.mxu0 0
    %156 = vmatpush1.bf16.msra.mxu0 0
    %157 = vmatprep.subr.bf16.mxu0 0
    %158 = vmatpush1.bf16.msra.mxu0 0
    %159 = vmatprep.subr.bf16.mxu0 0
    %160 = vmatpush1.bf16.msra.mxu0 0
    %161 = vmatprep.subr.bf16.mxu0 0
    %162 = vmatpush1.bf16.msra.mxu0 0
    %163 = vmatprep.subr.bf16.mxu0 0
    %164 = vmatpush1.bf16.msra.mxu0 0
    %165 = vmatprep.mubr.bf16.mxu0 0
    %166 = vmatmul.mubr.bf16.gmra.mrb[0].mxu0 %v131
    %v167 = vpop.f32.mrb[0].mxu0
    %v168 = vadd.f32 0.0, %v167
    %v169 = vpop.f32.mrb[0].mxu0
    %v170 = vpop.f32.mrb[0].mxu0
    %v171 = vpop.f32.mrb[0].mxu0
    %172 = vdwg.mxu0
    %v173 = vadd.f32 %v111, %v168
    %v174 = vmul.f32 %v173, 0.5
    %v175 = vtanh.pop %v174
    %v176 = vmul.f32 %v175, 0.5
    %v177 = vadd.f32 %v176, 0.5
    %v178 = vtanh.pop %v173
    %v179 = vmul.f32 %v177, 0.0
    %181 = vrot.lane.b32.xlu0 %v178, 64
    %v182 = vpop.permute.xlu0 %181
    %v184 = vmul.f32 %v177, %v182
    %186 = vrot.lane.b32.xlu0 %v184, 32
    %v187 = vpop.permute.xlu0 %186
    %v189 = vadd.f32 %v179, %v187
    %v190 = vtanh.pop %v189
    %192 = vrot.lane.b32.xlu0 %v190, 64
    %v193 = vpop.permute.xlu0 %192
    %v195 = vmul.f32 %v177, %v193
    %v196 = vpack.c.bf16 %v195, %v195
    %v198 = vlaneseq
    %v199 = vshrl.u32 %v198, 7
    %v200 = vsub.s32 0, %v199
    %v201 = vrot.slane %v52, %v200
    %204 = vrot.lane.b32.xlu0 %v196, 32
    %v205 = vpop.permute.xlu0 %204
    %v210 = vunpack.c.l.b16 %v44
    %v211 = vunpack.c.l.b16 %v45
    %v212 = vunpack.c.l.b16 %v46
    %v213 = vunpack.c.l.b16 %v47
    %v214 = vpack.c.b16 %v211, %v210
    %v215 = vpack.c.b16 %v213, %v212
    %v219 = vsel %vm129, %v205, 0
    %221 = vmatprep.subr.bf16.mxu0 0
    %222 = vmatpush1.bf16.msra.mxu0 %v214
    %223 = vmatprep.subr.bf16.mxu0 0
    %224 = vmatpush1.bf16.msra.mxu0 %v215
    %225 = vmatprep.subr.bf16.mxu0 0
    %226 = vmatpush1.bf16.msra.mxu0 0
    %227 = vmatprep.subr.bf16.mxu0 0
    %228 = vmatpush1.bf16.msra.mxu0 0
    %229 = vmatprep.subr.bf16.mxu0 0
    %230 = vmatpush1.bf16.msra.mxu0 0
    %231 = vmatprep.subr.bf16.mxu0 0
    %232 = vmatpush1.bf16.msra.mxu0 0
    %233 = vmatprep.subr.bf16.mxu0 0
    %234 = vmatpush1.bf16.msra.mxu0 0
    %235 = vmatprep.subr.bf16.mxu0 0
    %236 = vmatpush1.bf16.msra.mxu0 0
    %237 = vmatprep.subr.bf16.mxu0 0
    %238 = vmatpush1.bf16.msra.mxu0 0
    %239 = vmatprep.subr.bf16.mxu0 0
    %240 = vmatpush1.bf16.msra.mxu0 0
    %241 = vmatprep.subr.bf16.mxu0 0
    %242 = vmatpush1.bf16.msra.mxu0 0
    %243 = vmatprep.subr.bf16.mxu0 0
    %244 = vmatpush1.bf16.msra.mxu0 0
    %245 = vmatprep.subr.bf16.mxu0 0
    %246 = vmatpush1.bf16.msra.mxu0 0
    %247 = vmatprep.subr.bf16.mxu0 0
    %248 = vmatpush1.bf16.msra.mxu0 0
    %249 = vmatprep.subr.bf16.mxu0 0
    %250 = vmatpush1.bf16.msra.mxu0 0
    %251 = vmatprep.subr.bf16.mxu0 0
    %252 = vmatpush1.bf16.msra.mxu0 0
    %253 = vmatprep.mubr.bf16.mxu0 0
    %254 = vmatmul.mubr.bf16.gmra.mrb[0].mxu0 %v219
    %v255 = vpop.f32.mrb[0].mxu0
    %v256 = vadd.f32 %v201, %v255
    %v257 = vpop.f32.mrb[0].mxu0
    %v258 = vpop.f32.mrb[0].mxu0
    %v259 = vpop.f32.mrb[0].mxu0
    %260 = vdwg.mxu0
    %v265 = vunpack.c.l.b16 %v48
    %v266 = vunpack.c.l.b16 %v49
    %v267 = vunpack.c.l.b16 %v50
    %v268 = vunpack.c.l.b16 %v51
    %v269 = vpack.c.b16 %v266, %v265
    %v270 = vpack.c.b16 %v268, %v267
    %273 = vmatprep.subr.bf16.mxu0 0
    %274 = vmatpush1.bf16.msra.mxu0 %v269
    %275 = vmatprep.subr.bf16.mxu0 0
    %276 = vmatpush1.bf16.msra.mxu0 %v270
    %277 = vmatprep.subr.bf16.mxu0 0
    %278 = vmatpush1.bf16.msra.mxu0 0
    %279 = vmatprep.subr.bf16.mxu0 0
    %280 = vmatpush1.bf16.msra.mxu0 0
    %281 = vmatprep.subr.bf16.mxu0 0
    %282 = vmatpush1.bf16.msra.mxu0 0
    %283 = vmatprep.subr.bf16.mxu0 0
    %284 = vmatpush1.bf16.msra.mxu0 0
    %285 = vmatprep.subr.bf16.mxu0 0
    %286 = vmatpush1.bf16.msra.mxu0 0
    %287 = vmatprep.subr.bf16.mxu0 0
    %288 = vmatpush1.bf16.msra.mxu0 0
    %289 = vmatprep.subr.bf16.mxu0 0
    %290 = vmatpush1.bf16.msra.mxu0 0
    %291 = vmatprep.subr.bf16.mxu0 0
    %292 = vmatpush1.bf16.msra.mxu0 0
    %293 = vmatprep.subr.bf16.mxu0 0
    %294 = vmatpush1.bf16.msra.mxu0 0
    %295 = vmatprep.subr.bf16.mxu0 0
    %296 = vmatpush1.bf16.msra.mxu0 0
    %297 = vmatprep.subr.bf16.mxu0 0
    %298 = vmatpush1.bf16.msra.mxu0 0
    %299 = vmatprep.subr.bf16.mxu0 0
    %300 = vmatpush1.bf16.msra.mxu0 0
    %301 = vmatprep.subr.bf16.mxu0 0
    %302 = vmatpush1.bf16.msra.mxu0 0
    %303 = vmatprep.subr.bf16.mxu0 0
    %304 = vmatpush1.bf16.msra.mxu0 0
    %305 = vmatprep.mubr.bf16.mxu0 0
    %306 = vmatmul.mubr.bf16.gmra.mrb[0].mxu0 %v131
    %v307 = vpop.f32.mrb[0].mxu0
    %v308 = vadd.f32 0.0, %v307
    %v309 = vpop.f32.mrb[0].mxu0
    %v310 = vpop.f32.mrb[0].mxu0
    %v311 = vpop.f32.mrb[0].mxu0
    %312 = vdwg.mxu0
    %v313 = vadd.f32 %v256, %v308
    %v314 = vmul.f32 %v313, 0.5
    %v315 = vtanh.pop %v314
    %v316 = vmul.f32 %v315, 0.5
    %v317 = vadd.f32 %v316, 0.5
    %v318 = vtanh.pop %v313
    %v319 = vmul.f32 %v317, 0.0
    %321 = vrot.lane.b32.xlu0 %v318, 64
    %v322 = vpop.permute.xlu0 %321
    %v324 = vmul.f32 %v317, %v322
    %326 = vrot.lane.b32.xlu0 %v324, 32
    %v327 = vpop.permute.xlu0 %326
    %v329 = vadd.f32 %v319, %v327
    %v330 = vtanh.pop %v329
    %332 = vrot.lane.b32.xlu0 %v330, 64
    %v333 = vpop.permute.xlu0 %332
    %v335 = vmul.f32 %v317, %v333
    %v336 = vpack.c.bf16 %v335, %v335
    %337 = vmatprep.subr.bf16.mxu0 0
    %338 = vmatpush1.bf16.msra.mxu0 %v125
    %339 = vmatprep.subr.bf16.mxu0 0
    %340 = vmatpush1.bf16.msra.mxu0 %v126
    %341 = vmatprep.subr.bf16.mxu0 0
    %342 = vmatpush1.bf16.msra.mxu0 0
    %343 = vmatprep.subr.bf16.mxu0 0
    %344 = vmatpush1.bf16.msra.mxu0 0
    %345 = vmatprep.subr.bf16.mxu0 0
    %346 = vmatpush1.bf16.msra.mxu0 0
    %347 = vmatprep.subr.bf16.mxu0 0
    %348 = vmatpush1.bf16.msra.mxu0 0
    %349 = vmatprep.subr.bf16.mxu0 0
    %350 = vmatpush1.bf16.msra.mxu0 0
    %351 = vmatprep.subr.bf16.mxu0 0
    %352 = vmatpush1.bf16.msra.mxu0 0
    %353 = vmatprep.subr.bf16.mxu0 0
    %354 = vmatpush1.bf16.msra.mxu0 0
    %355 = vmatprep.subr.bf16.mxu0 0
    %356 = vmatpush1.bf16.msra.mxu0 0
    %357 = vmatprep.subr.bf16.mxu0 0
    %358 = vmatpush1.bf16.msra.mxu0 0
    %359 = vmatprep.subr.bf16.mxu0 0
    %360 = vmatpush1.bf16.msra.mxu0 0
    %361 = vmatprep.subr.bf16.mxu0 0
    %362 = vmatpush1.bf16.msra.mxu0 0
    %363 = vmatprep.subr.bf16.mxu0 0
    %364 = vmatpush1.bf16.msra.mxu0 0
    %365 = vmatprep.subr.bf16.mxu0 0
    %366 = vmatpush1.bf16.msra.mxu0 0
    %367 = vmatprep.subr.bf16.mxu0 0
    %368 = vmatpush1.bf16.msra.mxu0 0
    %369 = vmatprep.mubr.bf16.mxu0 0
    %370 = vmatmul.mubr.bf16.gmra.mrb[0].mxu0 %v219
    %v371 = vpop.f32.mrb[0].mxu0
    %v372 = vadd.f32 0.0, %v371
    %v373 = vpop.f32.mrb[0].mxu0
    %v374 = vpop.f32.mrb[0].mxu0
    %v375 = vpop.f32.mrb[0].mxu0
    %376 = vdwg.mxu0
    %v378 = vrot.slane %v372, 6
    %v380 = vadd.f32 %v111, %v378
    %v381 = vmul.f32 %v380, 0.5
    %v382 = vtanh.pop %v381
    %v383 = vmul.f32 %v382, 0.5
    %v384 = vadd.f32 %v383, 0.5
    %v385 = vtanh.pop %v380
    %v387 = vrot.slane %v189, 6
    %v389 = vmul.f32 %v384, %v387
    %391 = vrot.lane.b32.xlu0 %v385, 64
    %v392 = vpop.permute.xlu0 %391
    %v394 = vmul.f32 %v384, %v392
    %396 = vrot.lane.b32.xlu0 %v394, 32
    %v397 = vpop.permute.xlu0 %396
    %v399 = vadd.f32 %v389, %v397
    %v400 = vtanh.pop %v399
    %402 = vrot.lane.b32.xlu0 %v400, 64
    %v403 = vpop.permute.xlu0 %402
    %v405 = vmul.f32 %v384, %v403
    %v406 = vpack.c.bf16 %v405, %v405
    %v408 = vrot.slane %v406, 1
    %409 = vrot.lane.b32.xlu0 %v408, 32
    %v410 = vpop.permute.xlu0 %409
    %v412 = vsel %vm129, %v410, 0
    %414 = vmatprep.subr.bf16.mxu0 0
    %415 = vmatpush1.bf16.msra.mxu0 %v214
    %416 = vmatprep.subr.bf16.mxu0 0
    %417 = vmatpush1.bf16.msra.mxu0 %v215
    %418 = vmatprep.subr.bf16.mxu0 0
    %419 = vmatpush1.bf16.msra.mxu0 0
    %420 = vmatprep.subr.bf16.mxu0 0
    %421 = vmatpush1.bf16.msra.mxu0 0
    %422 = vmatprep.subr.bf16.mxu0 0
    %423 = vmatpush1.bf16.msra.mxu0 0
    %424 = vmatprep.subr.bf16.mxu0 0
    %425 = vmatpush1.bf16.msra.mxu0 0
    %426 = vmatprep.subr.bf16.mxu0 0
    %427 = vmatpush1.bf16.msra.mxu0 0
    %428 = vmatprep.subr.bf16.mxu0 0
    %429 = vmatpush1.bf16.msra.mxu0 0
    %430 = vmatprep.subr.bf16.mxu0 0
    %431 = vmatpush1.bf16.msra.mxu0 0
    %432 = vmatprep.subr.bf16.mxu0 0
    %433 = vmatpush1.bf16.msra.mxu0 0
    %434 = vmatprep.subr.bf16.mxu0 0
    %435 = vmatpush1.bf16.msra.mxu0 0
    %436 = vmatprep.subr.bf16.mxu0 0
    %437 = vmatpush1.bf16.msra.mxu0 0
    %438 = vmatprep.subr.bf16.mxu0 0
    %439 = vmatpush1.bf16.msra.mxu0 0
    %440 = vmatprep.subr.bf16.mxu0 0
    %441 = vmatpush1.bf16.msra.mxu0 0
    %442 = vmatprep.subr.bf16.mxu0 0
    %443 = vmatpush1.bf16.msra.mxu0 0
    %444 = vmatprep.subr.bf16.mxu0 0
    %445 = vmatpush1.bf16.msra.mxu0 0
    %446 = vmatprep.mubr.bf16.mxu0 0
    %447 = vmatmul.mubr.bf16.gmra.mrb[0].mxu0 %v412
    %v448 = vpop.f32.mrb[0].mxu0
    %v449 = vadd.f32 %v201, %v448
    %v450 = vpop.f32.mrb[0].mxu0
    %v451 = vpop.f32.mrb[0].mxu0
    %v452 = vpop.f32.mrb[0].mxu0
    %453 = vdwg.mxu0
    %455 = vrot.lane.b32.xlu0 %v336, 32
    %v456 = vpop.permute.xlu0 %455
    %v458 = vsel %vm129, %v456, 0
    %460 = vmatprep.subr.bf16.mxu0 0
    %461 = vmatpush1.bf16.msra.mxu0 %v269
    %462 = vmatprep.subr.bf16.mxu0 0
    %463 = vmatpush1.bf16.msra.mxu0 %v270
    %464 = vmatprep.subr.bf16.mxu0 0
    %465 = vmatpush1.bf16.msra.mxu0 0
    %466 = vmatprep.subr.bf16.mxu0 0
    %467 = vmatpush1.bf16.msra.mxu0 0
    %468 = vmatprep.subr.bf16.mxu0 0
    %469 = vmatpush1.bf16.msra.mxu0 0
    %470 = vmatprep.subr.bf16.mxu0 0
    %471 = vmatpush1.bf16.msra.mxu0 0
    %472 = vmatprep.subr.bf16.mxu0 0
    %473 = vmatpush1.bf16.msra.mxu0 0
    %474 = vmatprep.subr.bf16.mxu0 0
    %475 = vmatpush1.bf16.msra.mxu0 0
    %476 = vmatprep.subr.bf16.mxu0 0
    %477 = vmatpush1.bf16.msra.mxu0 0
    %478 = vmatprep.subr.bf16.mxu0 0
    %479 = vmatpush1.bf16.msra.mxu0 0
    %480 = vmatprep.subr.bf16.mxu0 0
    %481 = vmatpush1.bf16.msra.mxu0 0
    %482 = vmatprep.subr.bf16.mxu0 0
    %483 = vmatpush1.bf16.msra.mxu0 0
    %484 = vmatprep.subr.bf16.mxu0 0
    %485 = vmatpush1.bf16.msra.mxu0 0
    %486 = vmatprep.subr.bf16.mxu0 0
    %487 = vmatpush1.bf16.msra.mxu0 0
    %488 = vmatprep.subr.bf16.mxu0 0
    %489 = vmatpush1.bf16.msra.mxu0 0
    %490 = vmatprep.subr.bf16.mxu0 0
    %491 = vmatpush1.bf16.msra.mxu0 0
    %492 = vmatprep.mubr.bf16.mxu0 0
    %493 = vmatmul.mubr.bf16.gmra.mrb[0].mxu0 %v458
    %v494 = vpop.f32.mrb[0].mxu0
    %v495 = vadd.f32 0.0, %v494
    %v496 = vpop.f32.mrb[0].mxu0
    %v497 = vpop.f32.mrb[0].mxu0
    %v498 = vpop.f32.mrb[0].mxu0
    %499 = vdwg.mxu0
    %v500 = vadd.f32 %v449, %v495
    %v501 = vmul.f32 %v500, 0.5
    %v502 = vtanh.pop %v501
    %v503 = vmul.f32 %v502, 0.5
    %v504 = vadd.f32 %v503, 0.5
    %v505 = vtanh.pop %v500
    %v506 = vmul.f32 %v504, %v329
    %508 = vrot.lane.b32.xlu0 %v505, 64
    %v509 = vpop.permute.xlu0 %508
    %v511 = vmul.f32 %v504, %v509
    %513 = vrot.lane.b32.xlu0 %v511, 32
    %v514 = vpop.permute.xlu0 %513
    %v516 = vadd.f32 %v506, %v514
    %v517 = vtanh.pop %v516
    %519 = vrot.lane.b32.xlu0 %v517, 64
    %v520 = vpop.permute.xlu0 %519
    %v522 = vmul.f32 %v504, %v520
    %v523 = vpack.c.bf16 %v522, %v522
    %524 = vmatprep.subr.bf16.mxu0 0
    %525 = vmatpush1.bf16.msra.mxu0 %v125
    %526 = vmatprep.subr.bf16.mxu0 0
    %527 = vmatpush1.bf16.msra.mxu0 %v126
    %528 = vmatprep.subr.bf16.mxu0 0
    %529 = vmatpush1.bf16.msra.mxu0 0
    %530 = vmatprep.subr.bf16.mxu0 0
    %531 = vmatpush1.bf16.msra.mxu0 0
    %532 = vmatprep.subr.bf16.mxu0 0
    %533 = vmatpush1.bf16.msra.mxu0 0
    %534 = vmatprep.subr.bf16.mxu0 0
    %535 = vmatpush1.bf16.msra.mxu0 0
    %536 = vmatprep.subr.bf16.mxu0 0
    %537 = vmatpush1.bf16.msra.mxu0 0
    %538 = vmatprep.subr.bf16.mxu0 0
    %539 = vmatpush1.bf16.msra.mxu0 0
    %540 = vmatprep.subr.bf16.mxu0 0
    %541 = vmatpush1.bf16.msra.mxu0 0
    %542 = vmatprep.subr.bf16.mxu0 0
    %543 = vmatpush1.bf16.msra.mxu0 0
    %544 = vmatprep.subr.bf16.mxu0 0
    %545 = vmatpush1.bf16.msra.mxu0 0
    %546 = vmatprep.subr.bf16.mxu0 0
    %547 = vmatpush1.bf16.msra.mxu0 0
    %548 = vmatprep.subr.bf16.mxu0 0
    %549 = vmatpush1.bf16.msra.mxu0 0
    %550 = vmatprep.subr.bf16.mxu0 0
    %551 = vmatpush1.bf16.msra.mxu0 0
    %552 = vmatprep.subr.bf16.mxu0 0
    %553 = vmatpush1.bf16.msra.mxu0 0
    %554 = vmatprep.subr.bf16.mxu0 0
    %555 = vmatpush1.bf16.msra.mxu0 0
    %556 = vmatprep.mubr.bf16.mxu0 0
    %557 = vmatmul.mubr.bf16.gmra.mrb[0].mxu0 %v412
    %v558 = vpop.f32.mrb[0].mxu0
    %v559 = vadd.f32 0.0, %v558
    %v560 = vpop.f32.mrb[0].mxu0
    %v561 = vpop.f32.mrb[0].mxu0
    %v562 = vpop.f32.mrb[0].mxu0
    %563 = vdwg.mxu0
    %v565 = vrot.slane %v559, 4
    %v567 = vadd.f32 %v111, %v565
    %v568 = vmul.f32 %v567, 0.5
    %v569 = vtanh.pop %v568
    %v570 = vmul.f32 %v569, 0.5
    %v571 = vadd.f32 %v570, 0.5
    %v572 = vtanh.pop %v567
    %v574 = vrot.slane %v399, 6
    %v576 = vmul.f32 %v571, %v574
    %578 = vrot.lane.b32.xlu0 %v572, 64
    %v579 = vpop.permute.xlu0 %578
    %v581 = vmul.f32 %v571, %v579
    %583 = vrot.lane.b32.xlu0 %v581, 32
    %v584 = vpop.permute.xlu0 %583
    %v586 = vadd.f32 %v576, %v584
    %v587 = vtanh.pop %v586
    %589 = vrot.lane.b32.xlu0 %v587, 64
    %v590 = vpop.permute.xlu0 %589
    %v592 = vmul.f32 %v571, %v590
    %v593 = vpack.c.bf16 %v592, %v592
    %v595 = vrot.slane %v593, 2
    %596 = vrot.lane.b32.xlu0 %v595, 32
    %v597 = vpop.permute.xlu0 %596
    %v599 = vsel %vm129, %v597, 0
    %601 = vmatprep.subr.bf16.mxu0 0
    %602 = vmatpush1.bf16.msra.mxu0 %v214
    %603 = vmatprep.subr.bf16.mxu0 0
    %604 = vmatpush1.bf16.msra.mxu0 %v215
    %605 = vmatprep.subr.bf16.mxu0 0
    %606 = vmatpush1.bf16.msra.mxu0 0
    %607 = vmatprep.subr.bf16.mxu0 0
    %608 = vmatpush1.bf16.msra.mxu0 0
    %609 = vmatprep.subr.bf16.mxu0 0
    %610 = vmatpush1.bf16.msra.mxu0 0
    %611 = vmatprep.subr.bf16.mxu0 0
    %612 = vmatpush1.bf16.msra.mxu0 0
    %613 = vmatprep.subr.bf16.mxu0 0
    %614 = vmatpush1.bf16.msra.mxu0 0
    %615 = vmatprep.subr.bf16.mxu0 0
    %616 = vmatpush1.bf16.msra.mxu0 0
    %617 = vmatprep.subr.bf16.mxu0 0
    %618 = vmatpush1.bf16.msra.mxu0 0
    %619 = vmatprep.subr.bf16.mxu0 0
    %620 = vmatpush1.bf16.msra.mxu0 0
    %621 = vmatprep.subr.bf16.mxu0 0
    %622 = vmatpush1.bf16.msra.mxu0 0
    %623 = vmatprep.subr.bf16.mxu0 0
    %624 = vmatpush1.bf16.msra.mxu0 0
    %625 = vmatprep.subr.bf16.mxu0 0
    %626 = vmatpush1.bf16.msra.mxu0 0
    %627 = vmatprep.subr.bf16.mxu0 0
    %628 = vmatpush1.bf16.msra.mxu0 0
    %629 = vmatprep.subr.bf16.mxu0 0
    %630 = vmatpush1.bf16.msra.mxu0 0
    %631 = vmatprep.subr.bf16.mxu0 0
    %632 = vmatpush1.bf16.msra.mxu0 0
    %633 = vmatprep.mubr.bf16.mxu0 0
    %634 = vmatmul.mubr.bf16.gmra.mrb[0].mxu0 %v599
    %v635 = vpop.f32.mrb[0].mxu0
    %v636 = vadd.f32 %v201, %v635
    %v637 = vpop.f32.mrb[0].mxu0
    %v638 = vpop.f32.mrb[0].mxu0
    %v639 = vpop.f32.mrb[0].mxu0
    %640 = vdwg.mxu0
    %642 = vrot.lane.b32.xlu0 %v523, 32
    %v643 = vpop.permute.xlu0 %642
    %v645 = vsel %vm129, %v643, 0
    %647 = vmatprep.subr.bf16.mxu0 0
    %648 = vmatpush1.bf16.msra.mxu0 %v269
    %649 = vmatprep.subr.bf16.mxu0 0
    %650 = vmatpush1.bf16.msra.mxu0 %v270
    %651 = vmatprep.subr.bf16.mxu0 0
    %652 = vmatpush1.bf16.msra.mxu0 0
    %653 = vmatprep.subr.bf16.mxu0 0
    %654 = vmatpush1.bf16.msra.mxu0 0
    %655 = vmatprep.subr.bf16.mxu0 0
    %656 = vmatpush1.bf16.msra.mxu0 0
    %657 = vmatprep.subr.bf16.mxu0 0
    %658 = vmatpush1.bf16.msra.mxu0 0
    %659 = vmatprep.subr.bf16.mxu0 0
    %660 = vmatpush1.bf16.msra.mxu0 0
    %661 = vmatprep.subr.bf16.mxu0 0
    %662 = vmatpush1.bf16.msra.mxu0 0
    %663 = vmatprep.subr.bf16.mxu0 0
    %664 = vmatpush1.bf16.msra.mxu0 0
    %665 = vmatprep.subr.bf16.mxu0 0
    %666 = vmatpush1.bf16.msra.mxu0 0
    %667 = vmatprep.subr.bf16.mxu0 0
    %668 = vmatpush1.bf16.msra.mxu0 0
    %669 = vmatprep.subr.bf16.mxu0 0
    %670 = vmatpush1.bf16.msra.mxu0 0
    %671 = vmatprep.subr.bf16.mxu0 0
    %672 = vmatpush1.bf16.msra.mxu0 0
    %673 = vmatprep.subr.bf16.mxu0 0
    %674 = vmatpush1.bf16.msra.mxu0 0
    %675 = vmatprep.subr.bf16.mxu0 0
    %676 = vmatpush1.bf16.msra.mxu0 0
    %677 = vmatprep.subr.bf16.mxu0 0
    %678 = vmatpush1.bf16.msra.mxu0 0
    %679 = vmatprep.mubr.bf16.mxu0 0
    %680 = vmatmul.mubr.bf16.gmra.mrb[0].mxu0 %v645
    %v681 = vpop.f32.mrb[0].mxu0
    %v682 = vadd.f32 0.0, %v681
    %v683 = vpop.f32.mrb[0].mxu0
    %v684 = vpop.f32.mrb[0].mxu0
    %v685 = vpop.f32.mrb[0].mxu0
    %686 = vdwg.mxu0
    %v687 = vadd.f32 %v636, %v682
    %v688 = vmul.f32 %v687, 0.5
    %v689 = vtanh.pop %v688
    %v690 = vmul.f32 %v689, 0.5
    %v691 = vadd.f32 %v690, 0.5
    %v692 = vtanh.pop %v687
    %v693 = vmul.f32 %v691, %v516
    %695 = vrot.lane.b32.xlu0 %v692, 64
    %v696 = vpop.permute.xlu0 %695
    %v698 = vmul.f32 %v691, %v696
    %700 = vrot.lane.b32.xlu0 %v698, 32
    %v701 = vpop.permute.xlu0 %700
    %v703 = vadd.f32 %v693, %v701
    %v704 = vtanh.pop %v703
    %706 = vrot.lane.b32.xlu0 %v704, 64
    %v707 = vpop.permute.xlu0 %706
    %v709 = vmul.f32 %v691, %v707
    %v710 = vpack.c.bf16 %v709, %v709
    %711 = vmatprep.subr.bf16.mxu0 0
    %712 = vmatpush1.bf16.msra.mxu0 %v125
    %713 = vmatprep.subr.bf16.mxu0 0
    %714 = vmatpush1.bf16.msra.mxu0 %v126
    %715 = vmatprep.subr.bf16.mxu0 0
    %716 = vmatpush1.bf16.msra.mxu0 0
    %717 = vmatprep.subr.bf16.mxu0 0
    %718 = vmatpush1.bf16.msra.mxu0 0
    %719 = vmatprep.subr.bf16.mxu0 0
    %720 = vmatpush1.bf16.msra.mxu0 0
    %721 = vmatprep.subr.bf16.mxu0 0
    %722 = vmatpush1.bf16.msra.mxu0 0
    %723 = vmatprep.subr.bf16.mxu0 0
    %724 = vmatpush1.bf16.msra.mxu0 0
    %725 = vmatprep.subr.bf16.mxu0 0
    %726 = vmatpush1.bf16.msra.mxu0 0
    %727 = vmatprep.subr.bf16.mxu0 0
    %728 = vmatpush1.bf16.msra.mxu0 0
    %729 = vmatprep.subr.bf16.mxu0 0
    %730 = vmatpush1.bf16.msra.mxu0 0
    %731 = vmatprep.subr.bf16.mxu0 0
    %732 = vmatpush1.bf16.msra.mxu0 0
    %733 = vmatprep.subr.bf16.mxu0 0
    %734 = vmatpush1.bf16.msra.mxu0 0
    %735 = vmatprep.subr.bf16.mxu0 0
    %736 = vmatpush1.bf16.msra.mxu0 0
    %737 = vmatprep.subr.bf16.mxu0 0
    %738 = vmatpush1.bf16.msra.mxu0 0
    %739 = vmatprep.subr.bf16.mxu0 0
    %740 = vmatpush1.bf16.msra.mxu0 0
    %741 = vmatprep.subr.bf16.mxu0 0
    %742 = vmatpush1.bf16.msra.mxu0 0
    %743 = vmatprep.mubr.bf16.mxu0 0
    %744 = vmatmul.mubr.bf16.gmra.mrb[0].mxu0 %v599
    %v745 = vpop.f32.mrb[0].mxu0
    %v746 = vadd.f32 0.0, %v745
    %v747 = vpop.f32.mrb[0].mxu0
    %v748 = vpop.f32.mrb[0].mxu0
    %v749 = vpop.f32.mrb[0].mxu0
    %750 = vdwg.mxu0
    %v752 = vrot.slane %v746, 2
    %v754 = vadd.f32 %v111, %v752
    %v755 = vmul.f32 %v754, 0.5
    %v756 = vtanh.pop %v755
    %v757 = vmul.f32 %v756, 0.5
    %v758 = vadd.f32 %v757, 0.5
    %v759 = vtanh.pop %v754
    %v761 = vrot.slane %v586, 6
    %v763 = vmul.f32 %v758, %v761
    %765 = vrot.lane.b32.xlu0 %v759, 64
    %v766 = vpop.permute.xlu0 %765
    %v768 = vmul.f32 %v758, %v766
    %770 = vrot.lane.b32.xlu0 %v768, 32
    %v771 = vpop.permute.xlu0 %770
    %v773 = vadd.f32 %v763, %v771
    %v774 = vtanh.pop %v773
    %776 = vrot.lane.b32.xlu0 %v774, 64
    %v777 = vpop.permute.xlu0 %776
    %v779 = vmul.f32 %v758, %v777
    %v780 = vpack.c.bf16 %v779, %v779
    %v782 = vrot.slane %v780, 3
    %783 = vrot.lane.b32.xlu0 %v782, 32
    %v784 = vpop.permute.xlu0 %783
    %v786 = vsel %vm129, %v784, 0
    %788 = vmatprep.subr.bf16.mxu0 0
    %789 = vmatpush1.bf16.msra.mxu0 %v214
    %790 = vmatprep.subr.bf16.mxu0 0
    %791 = vmatpush1.bf16.msra.mxu0 %v215
    %792 = vmatprep.subr.bf16.mxu0 0
    %793 = vmatpush1.bf16.msra.mxu0 0
    %794 = vmatprep.subr.bf16.mxu0 0
    %795 = vmatpush1.bf16.msra.mxu0 0
    %796 = vmatprep.subr.bf16.mxu0 0
    %797 = vmatpush1.bf16.msra.mxu0 0
    %798 = vmatprep.subr.bf16.mxu0 0
    %799 = vmatpush1.bf16.msra.mxu0 0
    %800 = vmatprep.subr.bf16.mxu0 0
    %801 = vmatpush1.bf16.msra.mxu0 0
    %802 = vmatprep.subr.bf16.mxu0 0
    %803 = vmatpush1.bf16.msra.mxu0 0
    %804 = vmatprep.subr.bf16.mxu0 0
    %805 = vmatpush1.bf16.msra.mxu0 0
    %806 = vmatprep.subr.bf16.mxu0 0
    %807 = vmatpush1.bf16.msra.mxu0 0
    %808 = vmatprep.subr.bf16.mxu0 0
    %809 = vmatpush1.bf16.msra.mxu0 0
    %810 = vmatprep.subr.bf16.mxu0 0
    %811 = vmatpush1.bf16.msra.mxu0 0
    %812 = vmatprep.subr.bf16.mxu0 0
    %813 = vmatpush1.bf16.msra.mxu0 0
    %814 = vmatprep.subr.bf16.mxu0 0
    %815 = vmatpush1.bf16.msra.mxu0 0
    %816 = vmatprep.subr.bf16.mxu0 0
    %817 = vmatpush1.bf16.msra.mxu0 0
    %818 = vmatprep.subr.bf16.mxu0 0
    %819 = vmatpush1.bf16.msra.mxu0 0
    %820 = vmatprep.mubr.bf16.mxu0 0
    %821 = vmatmul.mubr.bf16.gmra.mrb[0].mxu0 %v786
    %v822 = vpop.f32.mrb[0].mxu0
    %v823 = vadd.f32 %v201, %v822
    %v824 = vpop.f32.mrb[0].mxu0
    %v825 = vpop.f32.mrb[0].mxu0
    %v826 = vpop.f32.mrb[0].mxu0
    %827 = vdwg.mxu0
    %829 = vrot.lane.b32.xlu0 %v710, 32
    %v830 = vpop.permute.xlu0 %829
    %v832 = vsel %vm129, %v830, 0
    %834 = vmatprep.subr.bf16.mxu0 0
    %835 = vmatpush1.bf16.msra.mxu0 %v269
    %836 = vmatprep.subr.bf16.mxu0 0
    %837 = vmatpush1.bf16.msra.mxu0 %v270
    %838 = vmatprep.subr.bf16.mxu0 0
    %839 = vmatpush1.bf16.msra.mxu0 0
    %840 = vmatprep.subr.bf16.mxu0 0
    %841 = vmatpush1.bf16.msra.mxu0 0
    %842 = vmatprep.subr.bf16.mxu0 0
    %843 = vmatpush1.bf16.msra.mxu0 0
    %844 = vmatprep.subr.bf16.mxu0 0
    %845 = vmatpush1.bf16.msra.mxu0 0
    %846 = vmatprep.subr.bf16.mxu0 0
    %847 = vmatpush1.bf16.msra.mxu0 0
    %848 = vmatprep.subr.bf16.mxu0 0
    %849 = vmatpush1.bf16.msra.mxu0 0
    %850 = vmatprep.subr.bf16.mxu0 0
    %851 = vmatpush1.bf16.msra.mxu0 0
    %852 = vmatprep.subr.bf16.mxu0 0
    %853 = vmatpush1.bf16.msra.mxu0 0
    %854 = vmatprep.subr.bf16.mxu0 0
    %855 = vmatpush1.bf16.msra.mxu0 0
    %856 = vmatprep.subr.bf16.mxu0 0
    %857 = vmatpush1.bf16.msra.mxu0 0
    %858 = vmatprep.subr.bf16.mxu0 0
    %859 = vmatpush1.bf16.msra.mxu0 0
    %860 = vmatprep.subr.bf16.mxu0 0
    %861 = vmatpush1.bf16.msra.mxu0 0
    %862 = vmatprep.subr.bf16.mxu0 0
    %863 = vmatpush1.bf16.msra.mxu0 0
    %864 = vmatprep.subr.bf16.mxu0 0
    %865 = vmatpush1.bf16.msra.mxu0 0
    %866 = vmatprep.mubr.bf16.mxu0 0
    %867 = vmatmul.mubr.bf16.gmra.mrb[0].mxu0 %v832
    %v868 = vpop.f32.mrb[0].mxu0
    %v869 = vadd.f32 0.0, %v868
    %v870 = vpop.f32.mrb[0].mxu0
    %v871 = vpop.f32.mrb[0].mxu0
    %v872 = vpop.f32.mrb[0].mxu0
    %873 = vdwg.mxu0
    %v874 = vadd.f32 %v823, %v869
    %v875 = vmul.f32 %v874, 0.5
    %v876 = vtanh.pop %v875
    %v877 = vmul.f32 %v876, 0.5
    %v878 = vadd.f32 %v877, 0.5
    %v879 = vtanh.pop %v874
    %v880 = vmul.f32 %v878, %v703
    %882 = vrot.lane.b32.xlu0 %v879, 64
    %v883 = vpop.permute.xlu0 %882
    %v885 = vmul.f32 %v878, %v883
    %887 = vrot.lane.b32.xlu0 %v885, 32
    %v888 = vpop.permute.xlu0 %887
    %v890 = vadd.f32 %v880, %v888
    %v891 = vtanh.pop %v890
    %893 = vrot.lane.b32.xlu0 %v891, 64
    %v894 = vpop.permute.xlu0 %893
    %v896 = vmul.f32 %v878, %v894
    %v897 = vpack.c.bf16 %v896, %v896
    %898 = vmatprep.subr.bf16.mxu0 0
    %899 = vmatpush1.bf16.msra.mxu0 %v125
    %900 = vmatprep.subr.bf16.mxu0 0
    %901 = vmatpush1.bf16.msra.mxu0 %v126
    %902 = vmatprep.subr.bf16.mxu0 0
    %903 = vmatpush1.bf16.msra.mxu0 0
    %904 = vmatprep.subr.bf16.mxu0 0
    %905 = vmatpush1.bf16.msra.mxu0 0
    %906 = vmatprep.subr.bf16.mxu0 0
    %907 = vmatpush1.bf16.msra.mxu0 0
    %908 = vmatprep.subr.bf16.mxu0 0
    %909 = vmatpush1.bf16.msra.mxu0 0
    %910 = vmatprep.subr.bf16.mxu0 0
    %911 = vmatpush1.bf16.msra.mxu0 0
    %912 = vmatprep.subr.bf16.mxu0 0
    %913 = vmatpush1.bf16.msra.mxu0 0
    %914 = vmatprep.subr.bf16.mxu0 0
    %915 = vmatpush1.bf16.msra.mxu0 0
    %916 = vmatprep.subr.bf16.mxu0 0
    %917 = vmatpush1.bf16.msra.mxu0 0
    %918 = vmatprep.subr.bf16.mxu0 0
    %919 = vmatpush1.bf16.msra.mxu0 0
    %920 = vmatprep.subr.bf16.mxu0 0
    %921 = vmatpush1.bf16.msra.mxu0 0
    %922 = vmatprep.subr.bf16.mxu0 0
    %923 = vmatpush1.bf16.msra.mxu0 0
    %924 = vmatprep.subr.bf16.mxu0 0
    %925 = vmatpush1.bf16.msra.mxu0 0
    %926 = vmatprep.subr.bf16.mxu0 0
    %927 = vmatpush1.bf16.msra.mxu0 0
    %928 = vmatprep.subr.bf16.mxu0 0
    %929 = vmatpush1.bf16.msra.mxu0 0
    %930 = vmatprep.mubr.bf16.mxu0 0
    %931 = vmatmul.mubr.bf16.gmra.mrb[0].mxu0 %v786
    %v932 = vpop.f32.mrb[0].mxu0
    %v933 = vadd.f32 0.0, %v932
    %v934 = vpop.f32.mrb[0].mxu0
    %v935 = vpop.f32.mrb[0].mxu0
    %v936 = vpop.f32.mrb[0].mxu0
    %937 = vdwg.mxu0
    %v938 = vadd.f32 %v114, %v933
    %v939 = vmul.f32 %v938, 0.5
    %v940 = vtanh.pop %v939
    %v941 = vmul.f32 %v940, 0.5
    %v942 = vadd.f32 %v941, 0.5
    %v943 = vtanh.pop %v938
    %v945 = vrot.slane %v773, 6
    %v947 = vmul.f32 %v942, %v945
    %949 = vrot.lane.b32.xlu0 %v943, 64
    %v950 = vpop.permute.xlu0 %949
    %v952 = vmul.f32 %v942, %v950
    %954 = vrot.lane.b32.xlu0 %v952, 32
    %v955 = vpop.permute.xlu0 %954
    %v957 = vadd.f32 %v947, %v955
    %v958 = vtanh.pop %v957
    %960 = vrot.lane.b32.xlu0 %v958, 64
    %v961 = vpop.permute.xlu0 %960
    %v963 = vmul.f32 %v942, %v961
    %v964 = vpack.c.bf16 %v963, %v963
    %966 = vrot.lane.b32.xlu0 %v964, 32
    %v967 = vpop.permute.xlu0 %966
    %v969 = vsel %vm129, %v967, 0
    %971 = vmatprep.subr.bf16.mxu0 0
    %972 = vmatpush1.bf16.msra.mxu0 %v214
    %973 = vmatprep.subr.bf16.mxu0 0
    %974 = vmatpush1.bf16.msra.mxu0 %v215
    %975 = vmatprep.subr.bf16.mxu0 0
    %976 = vmatpush1.bf16.msra.mxu0 0
    %977 = vmatprep.subr.bf16.mxu0 0
    %978 = vmatpush1.bf16.msra.mxu0 0
    %979 = vmatprep.subr.bf16.mxu0 0
    %980 = vmatpush1.bf16.msra.mxu0 0
    %981 = vmatprep.subr.bf16.mxu0 0
    %982 = vmatpush1.bf16.msra.mxu0 0
    %983 = vmatprep.subr.bf16.mxu0 0
    %984 = vmatpush1.bf16.msra.mxu0 0
    %985 = vmatprep.subr.bf16.mxu0 0
    %986 = vmatpush1.bf16.msra.mxu0 0
    %987 = vmatprep.subr.bf16.mxu0 0
    %988 = vmatpush1.bf16.msra.mxu0 0
    %989 = vmatprep.subr.bf16.mxu0 0
    %990 = vmatpush1.bf16.msra.mxu0 0
    %991 = vmatprep.subr.bf16.mxu0 0
    %992 = vmatpush1.bf16.msra.mxu0 0
    %993 = vmatprep.subr.bf16.mxu0 0
    %994 = vmatpush1.bf16.msra.mxu0 0
    %995 = vmatprep.subr.bf16.mxu0 0
    %996 = vmatpush1.bf16.msra.mxu0 0
    %997 = vmatprep.subr.bf16.mxu0 0
    %998 = vmatpush1.bf16.msra.mxu0 0
    %999 = vmatprep.subr.bf16.mxu0 0
    %1000 = vmatpush1.bf16.msra.mxu0 0
    %1001 = vmatprep.subr.bf16.mxu0 0
    %1002 = vmatpush1.bf16.msra.mxu0 0
    %1003 = vmatprep.mubr.bf16.mxu0 0
    %1004 = vmatmul.mubr.bf16.gmra.mrb[0].mxu0 %v969
    %v1005 = vpop.f32.mrb[0].mxu0
    %v1006 = vadd.f32 %v201, %v1005
    %v1007 = vpop.f32.mrb[0].mxu0
    %v1008 = vpop.f32.mrb[0].mxu0
    %v1009 = vpop.f32.mrb[0].mxu0
    %1010 = vdwg.mxu0
    %1012 = vrot.lane.b32.xlu0 %v897, 32
    %v1013 = vpop.permute.xlu0 %1012
    %v1015 = vsel %vm129, %v1013, 0
    %1017 = vmatprep.subr.bf16.mxu0 0
    %1018 = vmatpush1.bf16.msra.mxu0 %v269
    %1019 = vmatprep.subr.bf16.mxu0 0
    %1020 = vmatpush1.bf16.msra.mxu0 %v270
    %1021 = vmatprep.subr.bf16.mxu0 0
    %1022 = vmatpush1.bf16.msra.mxu0 0
    %1023 = vmatprep.subr.bf16.mxu0 0
    %1024 = vmatpush1.bf16.msra.mxu0 0
    %1025 = vmatprep.subr.bf16.mxu0 0
    %1026 = vmatpush1.bf16.msra.mxu0 0
    %1027 = vmatprep.subr.bf16.mxu0 0
    %1028 = vmatpush1.bf16.msra.mxu0 0
    %1029 = vmatprep.subr.bf16.mxu0 0
    %1030 = vmatpush1.bf16.msra.mxu0 0
    %1031 = vmatprep.subr.bf16.mxu0 0
    %1032 = vmatpush1.bf16.msra.mxu0 0
    %1033 = vmatprep.subr.bf16.mxu0 0
    %1034 = vmatpush1.bf16.msra.mxu0 0
    %1035 = vmatprep.subr.bf16.mxu0 0
    %1036 = vmatpush1.bf16.msra.mxu0 0
    %1037 = vmatprep.subr.bf16.mxu0 0
    %1038 = vmatpush1.bf16.msra.mxu0 0
    %1039 = vmatprep.subr.bf16.mxu0 0
    %1040 = vmatpush1.bf16.msra.mxu0 0
    %1041 = vmatprep.subr.bf16.mxu0 0
    %1042 = vmatpush1.bf16.msra.mxu0 0
    %1043 = vmatprep.subr.bf16.mxu0 0
    %1044 = vmatpush1.bf16.msra.mxu0 0
    %1045 = vmatprep.subr.bf16.mxu0 0
    %1046 = vmatpush1.bf16.msra.mxu0 0
    %1047 = vmatprep.subr.bf16.mxu0 0
    %1048 = vmatpush1.bf16.msra.mxu0 0
    %1049 = vmatprep.mubr.bf16.mxu0 0
    %1050 = vmatmul.mubr.bf16.gmra.mrb[0].mxu0 %v1015
    %v1051 = vpop.f32.mrb[0].mxu0
    %v1052 = vadd.f32 0.0, %v1051
    %v1053 = vpop.f32.mrb[0].mxu0
    %v1054 = vpop.f32.mrb[0].mxu0
    %v1055 = vpop.f32.mrb[0].mxu0
    %1056 = vdwg.mxu0
    %v1057 = vadd.f32 %v1006, %v1052
    %v1058 = vmul.f32 %v1057, 0.5
    %v1059 = vtanh.pop %v1058
    %v1060 = vmul.f32 %v1059, 0.5
    %v1061 = vadd.f32 %v1060, 0.5
    %v1062 = vtanh.pop %v1057
    %v1063 = vmul.f32 %v1061, %v890
    %1065 = vrot.lane.b32.xlu0 %v1062, 64
    %v1066 = vpop.permute.xlu0 %1065
    %v1068 = vmul.f32 %v1061, %v1066
    %1070 = vrot.lane.b32.xlu0 %v1068, 32
    %v1071 = vpop.permute.xlu0 %1070
    %v1073 = vadd.f32 %v1063, %v1071
    %v1074 = vtanh.pop %v1073
    %1076 = vrot.lane.b32.xlu0 %v1074, 64
    %v1077 = vpop.permute.xlu0 %1076
    %v1079 = vmul.f32 %v1061, %v1077
    %v1080 = vpack.c.bf16 %v1079, %v1079
    %1081 = vmatprep.subr.bf16.mxu0 0
    %1082 = vmatpush1.bf16.msra.mxu0 %v125
    %1083 = vmatprep.subr.bf16.mxu0 0
    %1084 = vmatpush1.bf16.msra.mxu0 %v126
    %1085 = vmatprep.subr.bf16.mxu0 0
    %1086 = vmatpush1.bf16.msra.mxu0 0
    %1087 = vmatprep.subr.bf16.mxu0 0
    %1088 = vmatpush1.bf16.msra.mxu0 0
    %1089 = vmatprep.subr.bf16.mxu0 0
    %1090 = vmatpush1.bf16.msra.mxu0 0
    %1091 = vmatprep.subr.bf16.mxu0 0
    %1092 = vmatpush1.bf16.msra.mxu0 0
    %1093 = vmatprep.subr.bf16.mxu0 0
    %1094 = vmatpush1.bf16.msra.mxu0 0
    %1095 = vmatprep.subr.bf16.mxu0 0
    %1096 = vmatpush1.bf16.msra.mxu0 0
    %1097 = vmatprep.subr.bf16.mxu0 0
    %1098 = vmatpush1.bf16.msra.mxu0 0
    %1099 = vmatprep.subr.bf16.mxu0 0
    %1100 = vmatpush1.bf16.msra.mxu0 0
    %1101 = vmatprep.subr.bf16.mxu0 0
    %1102 = vmatpush1.bf16.msra.mxu0 0
    %1103 = vmatprep.subr.bf16.mxu0 0
    %1104 = vmatpush1.bf16.msra.mxu0 0
    %1105 = vmatprep.subr.bf16.mxu0 0
    %1106 = vmatpush1.bf16.msra.mxu0 0
    %1107 = vmatprep.subr.bf16.mxu0 0
    %1108 = vmatpush1.bf16.msra.mxu0 0
    %1109 = vmatprep.subr.bf16.mxu0 0
    %1110 = vmatpush1.bf16.msra.mxu0 0
    %1111 = vmatprep.subr.bf16.mxu0 0
    %1112 = vmatpush1.bf16.msra.mxu0 0
    %1113 = vmatprep.mubr.bf16.mxu0 0
    %1114 = vmatmul.mubr.bf16.gmra.mrb[0].mxu0 %v969
    %v1115 = vpop.f32.mrb[0].mxu0
    %v1116 = vadd.f32 0.0, %v1115
    %v1117 = vpop.f32.mrb[0].mxu0
    %v1118 = vpop.f32.mrb[0].mxu0
    %v1119 = vpop.f32.mrb[0].mxu0
    %1120 = vdwg.mxu0
    %v1122 = vrot.slane %v1116, 6
    %v1124 = vadd.f32 %v114, %v1122
    %v1125 = vmul.f32 %v1124, 0.5
    %v1126 = vtanh.pop %v1125
    %v1127 = vmul.f32 %v1126, 0.5
    %v1128 = vadd.f32 %v1127, 0.5
    %v1129 = vtanh.pop %v1124
    %v1131 = vrot.slane %v957, 6
    %v1133 = vmul.f32 %v1128, %v1131
    %1135 = vrot.lane.b32.xlu0 %v1129, 64
    %v1136 = vpop.permute.xlu0 %1135
    %v1138 = vmul.f32 %v1128, %v1136
    %1140 = vrot.lane.b32.xlu0 %v1138, 32
    %v1141 = vpop.permute.xlu0 %1140
    %v1143 = vadd.f32 %v1133, %v1141
    %v1144 = vtanh.pop %v1143
    %1146 = vrot.lane.b32.xlu0 %v1144, 64
    %v1147 = vpop.permute.xlu0 %1146
    %v1149 = vmul.f32 %v1128, %v1147
    %v1150 = vpack.c.bf16 %v1149, %v1149
    %v1152 = vrot.slane %v1150, 1
    %1153 = vrot.lane.b32.xlu0 %v1152, 32
    %v1154 = vpop.permute.xlu0 %1153
    %v1156 = vsel %vm129, %v1154, 0
    %1158 = vmatprep.subr.bf16.mxu0 0
    %1159 = vmatpush1.bf16.msra.mxu0 %v214
    %1160 = vmatprep.subr.bf16.mxu0 0
    %1161 = vmatpush1.bf16.msra.mxu0 %v215
    %1162 = vmatprep.subr.bf16.mxu0 0
    %1163 = vmatpush1.bf16.msra.mxu0 0
    %1164 = vmatprep.subr.bf16.mxu0 0
    %1165 = vmatpush1.bf16.msra.mxu0 0
    %1166 = vmatprep.subr.bf16.mxu0 0
    %1167 = vmatpush1.bf16.msra.mxu0 0
    %1168 = vmatprep.subr.bf16.mxu0 0
    %1169 = vmatpush1.bf16.msra.mxu0 0
    %1170 = vmatprep.subr.bf16.mxu0 0
    %1171 = vmatpush1.bf16.msra.mxu0 0
    %1172 = vmatprep.subr.bf16.mxu0 0
    %1173 = vmatpush1.bf16.msra.mxu0 0
    %1174 = vmatprep.subr.bf16.mxu0 0
    %1175 = vmatpush1.bf16.msra.mxu0 0
    %1176 = vmatprep.subr.bf16.mxu0 0
    %1177 = vmatpush1.bf16.msra.mxu0 0
    %1178 = vmatprep.subr.bf16.mxu0 0
    %1179 = vmatpush1.bf16.msra.mxu0 0
    %1180 = vmatprep.subr.bf16.mxu0 0
    %1181 = vmatpush1.bf16.msra.mxu0 0
    %1182 = vmatprep.subr.bf16.mxu0 0
    %1183 = vmatpush1.bf16.msra.mxu0 0
    %1184 = vmatprep.subr.bf16.mxu0 0
    %1185 = vmatpush1.bf16.msra.mxu0 0
    %1186 = vmatprep.subr.bf16.mxu0 0
    %1187 = vmatpush1.bf16.msra.mxu0 0
    %1188 = vmatprep.subr.bf16.mxu0 0
    %1189 = vmatpush1.bf16.msra.mxu0 0
    %1190 = vmatprep.mubr.bf16.mxu0 0
    %1191 = vmatmul.mubr.bf16.gmra.mrb[0].mxu0 %v1156
    %v1192 = vpop.f32.mrb[0].mxu0
    %v1193 = vadd.f32 %v201, %v1192
    %v1194 = vpop.f32.mrb[0].mxu0
    %v1195 = vpop.f32.mrb[0].mxu0
    %v1196 = vpop.f32.mrb[0].mxu0
    %1197 = vdwg.mxu0
    %1199 = vrot.lane.b32.xlu0 %v1080, 32
    %v1200 = vpop.permute.xlu0 %1199
    %v1202 = vsel %vm129, %v1200, 0
    %1204 = vmatprep.subr.bf16.mxu0 0
    %1205 = vmatpush1.bf16.msra.mxu0 %v269
    %1206 = vmatprep.subr.bf16.mxu0 0
    %1207 = vmatpush1.bf16.msra.mxu0 %v270
    %1208 = vmatprep.subr.bf16.mxu0 0
    %1209 = vmatpush1.bf16.msra.mxu0 0
    %1210 = vmatprep.subr.bf16.mxu0 0
    %1211 = vmatpush1.bf16.msra.mxu0 0
    %1212 = vmatprep.subr.bf16.mxu0 0
    %1213 = vmatpush1.bf16.msra.mxu0 0
    %1214 = vmatprep.subr.bf16.mxu0 0
    %1215 = vmatpush1.bf16.msra.mxu0 0
    %1216 = vmatprep.subr.bf16.mxu0 0
    %1217 = vmatpush1.bf16.msra.mxu0 0
    %1218 = vmatprep.subr.bf16.mxu0 0
    %1219 = vmatpush1.bf16.msra.mxu0 0
    %1220 = vmatprep.subr.bf16.mxu0 0
    %1221 = vmatpush1.bf16.msra.mxu0 0
    %1222 = vmatprep.subr.bf16.mxu0 0
    %1223 = vmatpush1.bf16.msra.mxu0 0
    %1224 = vmatprep.subr.bf16.mxu0 0
    %1225 = vmatpush1.bf16.msra.mxu0 0
    %1226 = vmatprep.subr.bf16.mxu0 0
    %1227 = vmatpush1.bf16.msra.mxu0 0
    %1228 = vmatprep.subr.bf16.mxu0 0
    %1229 = vmatpush1.bf16.msra.mxu0 0
    %1230 = vmatprep.subr.bf16.mxu0 0
    %1231 = vmatpush1.bf16.msra.mxu0 0
    %1232 = vmatprep.subr.bf16.mxu0 0
    %1233 = vmatpush1.bf16.msra.mxu0 0
    %1234 = vmatprep.subr.bf16.mxu0 0
    %1235 = vmatpush1.bf16.msra.mxu0 0
    %1236 = vmatprep.mubr.bf16.mxu0 0
    %1237 = vmatmul.mubr.bf16.gmra.mrb[0].mxu0 %v1202
    %v1238 = vpop.f32.mrb[0].mxu0
    %v1239 = vadd.f32 0.0, %v1238
    %v1240 = vpop.f32.mrb[0].mxu0
    %v1241 = vpop.f32.mrb[0].mxu0
    %v1242 = vpop.f32.mrb[0].mxu0
    %1243 = vdwg.mxu0
    %v1244 = vadd.f32 %v1193, %v1239
    %v1245 = vmul.f32 %v1244, 0.5
    %v1246 = vtanh.pop %v1245
    %v1247 = vmul.f32 %v1246, 0.5
    %v1248 = vadd.f32 %v1247, 0.5
    %v1249 = vtanh.pop %v1244
    %v1250 = vmul.f32 %v1248, %v1073
    %1252 = vrot.lane.b32.xlu0 %v1249, 64
    %v1253 = vpop.permute.xlu0 %1252
    %v1255 = vmul.f32 %v1248, %v1253
    %1257 = vrot.lane.b32.xlu0 %v1255, 32
    %v1258 = vpop.permute.xlu0 %1257
    %v1260 = vadd.f32 %v1250, %v1258
    %v1261 = vtanh.pop %v1260
    %1263 = vrot.lane.b32.xlu0 %v1261, 64
    %v1264 = vpop.permute.xlu0 %1263
    %v1266 = vmul.f32 %v1248, %v1264
    %v1267 = vpack.c.bf16 %v1266, %v1266
    %1268 = vmatprep.subr.bf16.mxu0 0
    %1269 = vmatpush1.bf16.msra.mxu0 %v125
    %1270 = vmatprep.subr.bf16.mxu0 0
    %1271 = vmatpush1.bf16.msra.mxu0 %v126
    %1272 = vmatprep.subr.bf16.mxu0 0
    %1273 = vmatpush1.bf16.msra.mxu0 0
    %1274 = vmatprep.subr.bf16.mxu0 0
    %1275 = vmatpush1.bf16.msra.mxu0 0
    %1276 = vmatprep.subr.bf16.mxu0 0
    %1277 = vmatpush1.bf16.msra.mxu0 0
    %1278 = vmatprep.subr.bf16.mxu0 0
    %1279 = vmatpush1.bf16.msra.mxu0 0
    %1280 = vmatprep.subr.bf16.mxu0 0
    %1281 = vmatpush1.bf16.msra.mxu0 0
    %1282 = vmatprep.subr.bf16.mxu0 0
    %1283 = vmatpush1.bf16.msra.mxu0 0
    %1284 = vmatprep.subr.bf16.mxu0 0
    %1285 = vmatpush1.bf16.msra.mxu0 0
    %1286 = vmatprep.subr.bf16.mxu0 0
    %1287 = vmatpush1.bf16.msra.mxu0 0
    %1288 = vmatprep.subr.bf16.mxu0 0
    %1289 = vmatpush1.bf16.msra.mxu0 0
    %1290 = vmatprep.subr.bf16.mxu0 0
    %1291 = vmatpush1.bf16.msra.mxu0 0
    %1292 = vmatprep.subr.bf16.mxu0 0
    %1293 = vmatpush1.bf16.msra.mxu0 0
    %1294 = vmatprep.subr.bf16.mxu0 0
    %1295 = vmatpush1.bf16.msra.mxu0 0
    %1296 = vmatprep.subr.bf16.mxu0 0
    %1297 = vmatpush1.bf16.msra.mxu0 0
    %1298 = vmatprep.subr.bf16.mxu0 0
    %1299 = vmatpush1.bf16.msra.mxu0 0
    %1300 = vmatprep.mubr.bf16.mxu0 0
    %1301 = vmatmul.mubr.bf16.gmra.mrb[0].mxu0 %v1156
    %v1302 = vpop.f32.mrb[0].mxu0
    %v1303 = vadd.f32 0.0, %v1302
    %v1304 = vpop.f32.mrb[0].mxu0
    %v1305 = vpop.f32.mrb[0].mxu0
    %v1306 = vpop.f32.mrb[0].mxu0
    %1307 = vdwg.mxu0
    %v1309 = vrot.slane %v1303, 4
    %v1311 = vadd.f32 %v114, %v1309
    %v1312 = vmul.f32 %v1311, 0.5
    %v1313 = vtanh.pop %v1312
    %v1314 = vmul.f32 %v1313, 0.5
    %v1315 = vadd.f32 %v1314, 0.5
    %v1316 = vtanh.pop %v1311
    %v1318 = vrot.slane %v1143, 6
    %v1320 = vmul.f32 %v1315, %v1318
    %1322 = vrot.lane.b32.xlu0 %v1316, 64
    %v1323 = vpop.permute.xlu0 %1322
    %v1325 = vmul.f32 %v1315, %v1323
    %1327 = vrot.lane.b32.xlu0 %v1325, 32
    %v1328 = vpop.permute.xlu0 %1327
    %v1330 = vadd.f32 %v1320, %v1328
    %v1331 = vtanh.pop %v1330
    %1333 = vrot.lane.b32.xlu0 %v1331, 64
    %v1334 = vpop.permute.xlu0 %1333
    %v1336 = vmul.f32 %v1315, %v1334
    %v1337 = vpack.c.bf16 %v1336, %v1336
    %v1339 = vrot.slane %v1337, 2
    %1340 = vrot.lane.b32.xlu0 %v1339, 32
    %v1341 = vpop.permute.xlu0 %1340
    %v1343 = vsel %vm129, %v1341, 0
    %1345 = vmatprep.subr.bf16.mxu0 0
    %1346 = vmatpush1.bf16.msra.mxu0 %v214
    %1347 = vmatprep.subr.bf16.mxu0 0
    %1348 = vmatpush1.bf16.msra.mxu0 %v215
    %1349 = vmatprep.subr.bf16.mxu0 0
    %1350 = vmatpush1.bf16.msra.mxu0 0
    %1351 = vmatprep.subr.bf16.mxu0 0
    %1352 = vmatpush1.bf16.msra.mxu0 0
    %1353 = vmatprep.subr.bf16.mxu0 0
    %1354 = vmatpush1.bf16.msra.mxu0 0
    %1355 = vmatprep.subr.bf16.mxu0 0
    %1356 = vmatpush1.bf16.msra.mxu0 0
    %1357 = vmatprep.subr.bf16.mxu0 0
    %1358 = vmatpush1.bf16.msra.mxu0 0
    %1359 = vmatprep.subr.bf16.mxu0 0
    %1360 = vmatpush1.bf16.msra.mxu0 0
    %1361 = vmatprep.subr.bf16.mxu0 0
    %1362 = vmatpush1.bf16.msra.mxu0 0
    %1363 = vmatprep.subr.bf16.mxu0 0
    %1364 = vmatpush1.bf16.msra.mxu0 0
    %1365 = vmatprep.subr.bf16.mxu0 0
    %1366 = vmatpush1.bf16.msra.mxu0 0
    %1367 = vmatprep.subr.bf16.mxu0 0
    %1368 = vmatpush1.bf16.msra.mxu0 0
    %1369 = vmatprep.subr.bf16.mxu0 0
    %1370 = vmatpush1.bf16.msra.mxu0 0
    %1371 = vmatprep.subr.bf16.mxu0 0
    %1372 = vmatpush1.bf16.msra.mxu0 0
    %1373 = vmatprep.subr.bf16.mxu0 0
    %1374 = vmatpush1.bf16.msra.mxu0 0
    %1375 = vmatprep.subr.bf16.mxu0 0
    %1376 = vmatpush1.bf16.msra.mxu0 0
    %1377 = vmatprep.mubr.bf16.mxu0 0
    %1378 = vmatmul.mubr.bf16.gmra.mrb[0].mxu0 %v1343
    %v1379 = vpop.f32.mrb[0].mxu0
    %v1380 = vadd.f32 %v201, %v1379
    %v1381 = vpop.f32.mrb[0].mxu0
    %v1382 = vpop.f32.mrb[0].mxu0
    %v1383 = vpop.f32.mrb[0].mxu0
    %1384 = vdwg.mxu0
    %1386 = vrot.lane.b32.xlu0 %v1267, 32
    %v1387 = vpop.permute.xlu0 %1386
    %v1389 = vsel %vm129, %v1387, 0
    %1391 = vmatprep.subr.bf16.mxu0 0
    %1392 = vmatpush1.bf16.msra.mxu0 %v269
    %1393 = vmatprep.subr.bf16.mxu0 0
    %1394 = vmatpush1.bf16.msra.mxu0 %v270
    %1395 = vmatprep.subr.bf16.mxu0 0
    %1396 = vmatpush1.bf16.msra.mxu0 0
    %1397 = vmatprep.subr.bf16.mxu0 0
    %1398 = vmatpush1.bf16.msra.mxu0 0
    %1399 = vmatprep.subr.bf16.mxu0 0
    %1400 = vmatpush1.bf16.msra.mxu0 0
    %1401 = vmatprep.subr.bf16.mxu0 0
    %1402 = vmatpush1.bf16.msra.mxu0 0
    %1403 = vmatprep.subr.bf16.mxu0 0
    %1404 = vmatpush1.bf16.msra.mxu0 0
    %1405 = vmatprep.subr.bf16.mxu0 0
    %1406 = vmatpush1.bf16.msra.mxu0 0
    %1407 = vmatprep.subr.bf16.mxu0 0
    %1408 = vmatpush1.bf16.msra.mxu0 0
    %1409 = vmatprep.subr.bf16.mxu0 0
    %1410 = vmatpush1.bf16.msra.mxu0 0
    %1411 = vmatprep.subr.bf16.mxu0 0
    %1412 = vmatpush1.bf16.msra.mxu0 0
    %1413 = vmatprep.subr.bf16.mxu0 0
    %1414 = vmatpush1.bf16.msra.mxu0 0
    %1415 = vmatprep.subr.bf16.mxu0 0
    %1416 = vmatpush1.bf16.msra.mxu0 0
    %1417 = vmatprep.subr.bf16.mxu0 0
    %1418 = vmatpush1.bf16.msra.mxu0 0
    %1419 = vmatprep.subr.bf16.mxu0 0
    %1420 = vmatpush1.bf16.msra.mxu0 0
    %1421 = vmatprep.subr.bf16.mxu0 0
    %1422 = vmatpush1.bf16.msra.mxu0 0
    %1423 = vmatprep.mubr.bf16.mxu0 0
    %1424 = vmatmul.mubr.bf16.gmra.mrb[0].mxu0 %v1389
    %v1425 = vpop.f32.mrb[0].mxu0
    %v1426 = vadd.f32 0.0, %v1425
    %v1427 = vpop.f32.mrb[0].mxu0
    %v1428 = vpop.f32.mrb[0].mxu0
    %v1429 = vpop.f32.mrb[0].mxu0
    %1430 = vdwg.mxu0
    %v1431 = vadd.f32 %v1380, %v1426
    %v1432 = vmul.f32 %v1431, 0.5
    %v1433 = vtanh.pop %v1432
    %v1434 = vmul.f32 %v1433, 0.5
    %v1435 = vadd.f32 %v1434, 0.5
    %v1436 = vtanh.pop %v1431
    %v1437 = vmul.f32 %v1435, %v1260
    %1439 = vrot.lane.b32.xlu0 %v1436, 64
    %v1440 = vpop.permute.xlu0 %1439
    %v1442 = vmul.f32 %v1435, %v1440
    %1444 = vrot.lane.b32.xlu0 %v1442, 32
    %v1445 = vpop.permute.xlu0 %1444
    %v1447 = vadd.f32 %v1437, %v1445
    %v1448 = vtanh.pop %v1447
    %1450 = vrot.lane.b32.xlu0 %v1448, 64
    %v1451 = vpop.permute.xlu0 %1450
    %v1453 = vmul.f32 %v1435, %v1451
    %v1454 = vpack.c.bf16 %v1453, %v1453
    %1455 = vmatprep.subr.bf16.mxu0 0
    %1456 = vmatpush1.bf16.msra.mxu0 %v125
    %1457 = vmatprep.subr.bf16.mxu0 0
    %1458 = vmatpush1.bf16.msra.mxu0 %v126
    %1459 = vmatprep.subr.bf16.mxu0 0
    %1460 = vmatpush1.bf16.msra.mxu0 0
    %1461 = vmatprep.subr.bf16.mxu0 0
    %1462 = vmatpush1.bf16.msra.mxu0 0
    %1463 = vmatprep.subr.bf16.mxu0 0
    %1464 = vmatpush1.bf16.msra.mxu0 0
    %1465 = vmatprep.subr.bf16.mxu0 0
    %1466 = vmatpush1.bf16.msra.mxu0 0
    %1467 = vmatprep.subr.bf16.mxu0 0
    %1468 = vmatpush1.bf16.msra.mxu0 0
    %1469 = vmatprep.subr.bf16.mxu0 0
    %1470 = vmatpush1.bf16.msra.mxu0 0
    %1471 = vmatprep.subr.bf16.mxu0 0
    %1472 = vmatpush1.bf16.msra.mxu0 0
    %1473 = vmatprep.subr.bf16.mxu0 0
    %1474 = vmatpush1.bf16.msra.mxu0 0
    %1475 = vmatprep.subr.bf16.mxu0 0
    %1476 = vmatpush1.bf16.msra.mxu0 0
    %1477 = vmatprep.subr.bf16.mxu0 0
    %1478 = vmatpush1.bf16.msra.mxu0 0
    %1479 = vmatprep.subr.bf16.mxu0 0
    %1480 = vmatpush1.bf16.msra.mxu0 0
    %1481 = vmatprep.subr.bf16.mxu0 0
    %1482 = vmatpush1.bf16.msra.mxu0 0
    %1483 = vmatprep.subr.bf16.mxu0 0
    %1484 = vmatpush1.bf16.msra.mxu0 0
    %1485 = vmatprep.subr.bf16.mxu0 0
    %1486 = vmatpush1.bf16.msra.mxu0 0
    %1487 = vmatprep.mubr.bf16.mxu0 0
    %1488 = vmatmul.mubr.bf16.gmra.mrb[0].mxu0 %v1343
    %v1489 = vpop.f32.mrb[0].mxu0
    %v1490 = vadd.f32 0.0, %v1489
    %v1491 = vpop.f32.mrb[0].mxu0
    %v1492 = vpop.f32.mrb[0].mxu0
    %v1493 = vpop.f32.mrb[0].mxu0
    %1494 = vdwg.mxu0
    %v1496 = vrot.slane %v1490, 2
    %v1498 = vadd.f32 %v114, %v1496
    %v1499 = vmul.f32 %v1498, 0.5
    %v1500 = vtanh.pop %v1499
    %v1501 = vmul.f32 %v1500, 0.5
    %v1502 = vadd.f32 %v1501, 0.5
    %v1503 = vtanh.pop %v1498
    %v1505 = vrot.slane %v1330, 6
    %v1507 = vmul.f32 %v1502, %v1505
    %1509 = vrot.lane.b32.xlu0 %v1503, 64
    %v1510 = vpop.permute.xlu0 %1509
    %v1512 = vmul.f32 %v1502, %v1510
    %1514 = vrot.lane.b32.xlu0 %v1512, 32
    %v1515 = vpop.permute.xlu0 %1514
    %v1517 = vadd.f32 %v1507, %v1515
    %v1518 = vtanh.pop %v1517
    %1520 = vrot.lane.b32.xlu0 %v1518, 64
    %v1521 = vpop.permute.xlu0 %1520
    %v1523 = vmul.f32 %v1502, %v1521
    %v1524 = vpack.c.bf16 %v1523, %v1523
    %v1526 = vrot.slane %v1524, 3
    %1527 = vrot.lane.b32.xlu0 %v1526, 32
    %v1528 = vpop.permute.xlu0 %1527
    %v1530 = vsel %vm129, %v1528, 0
    %1532 = vmatprep.subr.bf16.mxu0 0
    %1533 = vmatpush1.bf16.msra.mxu0 %v214
    %1534 = vmatprep.subr.bf16.mxu0 0
    %1535 = vmatpush1.bf16.msra.mxu0 %v215
    %1536 = vmatprep.subr.bf16.mxu0 0
    %1537 = vmatpush1.bf16.msra.mxu0 0
    %1538 = vmatprep.subr.bf16.mxu0 0
    %1539 = vmatpush1.bf16.msra.mxu0 0
    %1540 = vmatprep.subr.bf16.mxu0 0
    %1541 = vmatpush1.bf16.msra.mxu0 0
    %1542 = vmatprep.subr.bf16.mxu0 0
    %1543 = vmatpush1.bf16.msra.mxu0 0
    %1544 = vmatprep.subr.bf16.mxu0 0
    %1545 = vmatpush1.bf16.msra.mxu0 0
    %1546 = vmatprep.subr.bf16.mxu0 0
    %1547 = vmatpush1.bf16.msra.mxu0 0
    %1548 = vmatprep.subr.bf16.mxu0 0
    %1549 = vmatpush1.bf16.msra.mxu0 0
    %1550 = vmatprep.subr.bf16.mxu0 0
    %1551 = vmatpush1.bf16.msra.mxu0 0
    %1552 = vmatprep.subr.bf16.mxu0 0
    %1553 = vmatpush1.bf16.msra.mxu0 0
    %1554 = vmatprep.subr.bf16.mxu0 0
    %1555 = vmatpush1.bf16.msra.mxu0 0
    %1556 = vmatprep.subr.bf16.mxu0 0
    %1557 = vmatpush1.bf16.msra.mxu0 0
    %1558 = vmatprep.subr.bf16.mxu0 0
    %1559 = vmatpush1.bf16.msra.mxu0 0
    %1560 = vmatprep.subr.bf16.mxu0 0
    %1561 = vmatpush1.bf16.msra.mxu0 0
    %1562 = vmatprep.subr.bf16.mxu0 0
    %1563 = vmatpush1.bf16.msra.mxu0 0
    %1564 = vmatprep.mubr.bf16.mxu0 0
    %1565 = vmatmul.mubr.bf16.gmra.mrb[0].mxu0 %v1530
    %v1566 = vpop.f32.mrb[0].mxu0
    %v1567 = vadd.f32 %v201, %v1566
    %v1568 = vpop.f32.mrb[0].mxu0
    %v1569 = vpop.f32.mrb[0].mxu0
    %v1570 = vpop.f32.mrb[0].mxu0
    %1571 = vdwg.mxu0
    %1573 = vrot.lane.b32.xlu0 %v1454, 32
    %v1574 = vpop.permute.xlu0 %1573
    %v1576 = vsel %vm129, %v1574, 0
    %1578 = vmatprep.subr.bf16.mxu0 0
    %1579 = vmatpush1.bf16.msra.mxu0 %v269
    %1580 = vmatprep.subr.bf16.mxu0 0
    %1581 = vmatpush1.bf16.msra.mxu0 %v270
    %1582 = vmatprep.subr.bf16.mxu0 0
    %1583 = vmatpush1.bf16.msra.mxu0 0
    %1584 = vmatprep.subr.bf16.mxu0 0
    %1585 = vmatpush1.bf16.msra.mxu0 0
    %1586 = vmatprep.subr.bf16.mxu0 0
    %1587 = vmatpush1.bf16.msra.mxu0 0
    %1588 = vmatprep.subr.bf16.mxu0 0
    %1589 = vmatpush1.bf16.msra.mxu0 0
    %1590 = vmatprep.subr.bf16.mxu0 0
    %1591 = vmatpush1.bf16.msra.mxu0 0
    %1592 = vmatprep.subr.bf16.mxu0 0
    %1593 = vmatpush1.bf16.msra.mxu0 0
    %1594 = vmatprep.subr.bf16.mxu0 0
    %1595 = vmatpush1.bf16.msra.mxu0 0
    %1596 = vmatprep.subr.bf16.mxu0 0
    %1597 = vmatpush1.bf16.msra.mxu0 0
    %1598 = vmatprep.subr.bf16.mxu0 0
    %1599 = vmatpush1.bf16.msra.mxu0 0
    %1600 = vmatprep.subr.bf16.mxu0 0
    %1601 = vmatpush1.bf16.msra.mxu0 0
    %1602 = vmatprep.subr.bf16.mxu0 0
    %1603 = vmatpush1.bf16.msra.mxu0 0
    %1604 = vmatprep.subr.bf16.mxu0 0
    %1605 = vmatpush1.bf16.msra.mxu0 0
    %1606 = vmatprep.subr.bf16.mxu0 0
    %1607 = vmatpush1.bf16.msra.mxu0 0
    %1608 = vmatprep.subr.bf16.mxu0 0
    %1609 = vmatpush1.bf16.msra.mxu0 0
    %1610 = vmatprep.mubr.bf16.mxu0 0
    %1611 = vmatmul.mubr.bf16.gmra.mrb[0].mxu0 %v1576
    %v1612 = vpop.f32.mrb[0].mxu0
    %v1613 = vadd.f32 0.0, %v1612
    %v1614 = vpop.f32.mrb[0].mxu0
    %v1615 = vpop.f32.mrb[0].mxu0
    %v1616 = vpop.f32.mrb[0].mxu0
    %1617 = vdwg.mxu0
    %v1618 = vadd.f32 %v1567, %v1613
    %v1619 = vmul.f32 %v1618, 0.5
    %v1620 = vtanh.pop %v1619
    %v1621 = vmul.f32 %v1620, 0.5
    %v1622 = vadd.f32 %v1621, 0.5
    %v1623 = vtanh.pop %v1618
    %v1624 = vmul.f32 %v1622, %v1447
    %1626 = vrot.lane.b32.xlu0 %v1623, 64
    %v1627 = vpop.permute.xlu0 %1626
    %v1629 = vmul.f32 %v1622, %v1627
    %1631 = vrot.lane.b32.xlu0 %v1629, 32
    %v1632 = vpop.permute.xlu0 %1631
    %v1634 = vadd.f32 %v1624, %v1632
    %v1635 = vtanh.pop %v1634
    %1637 = vrot.lane.b32.xlu0 %v1635, 64
    %v1638 = vpop.permute.xlu0 %1637
    %v1640 = vmul.f32 %v1622, %v1638
    %v1641 = vld [vmem:[%s7] sm:$0xff]
    %v1642 = vld [vmem:[%s7 + $0x8] sm:$0xff]
    %v1643 = vld [vmem:[%s7 + $0x10] sm:$0xff]
    %v1644 = vld [vmem:[%s7 + $0x18] sm:$0xff]
    %v1645 = vld [vmem:[%s8] sm:$0x1]
    %v1647 = vlaneseq
    %v1648 = vshrl.u32 %v1647, 7
    %v1649 = vsub.s32 0, %v1648
    %v1650 = vrot.slane %v1645, %v1649
    %1653 = vrot.lane.b32.xlu0 %v1640, 32
    %v1654 = vpop.permute.xlu0 %1653
    %v1655 = vsel %vm129, %v1654, 0
    %1657 = vmatprep.subr.mxu0 0.0
    %1658 = vmatpush1.msra.mxu0 %v1641
    %1659 = vmatprep.subr.mxu0 0.0
    %1660 = vmatpush1.msra.mxu0 %v1642
    %1661 = vmatprep.subr.mxu0 0.0
    %1662 = vmatpush1.msra.mxu0 %v1643
    %1663 = vmatprep.subr.mxu0 0.0
    %1664 = vmatpush1.msra.mxu0 %v1644
    %1665 = vmatprep.subr.mxu0 0.0
    %1666 = vmatpush1.msra.mxu0 0.0
    %1667 = vmatprep.subr.mxu0 0.0
    %1668 = vmatpush1.msra.mxu0 0.0
    %1669 = vmatprep.subr.mxu0 0.0
    %1670 = vmatpush1.msra.mxu0 0.0
    %1671 = vmatprep.subr.mxu0 0.0
    %1672 = vmatpush1.msra.mxu0 0.0
    %1673 = vmatprep.subr.mxu0 0.0
    %1674 = vmatpush1.msra.mxu0 0.0
    %1675 = vmatprep.subr.mxu0 0.0
    %1676 = vmatpush1.msra.mxu0 0.0
    %1677 = vmatprep.subr.mxu0 0.0
    %1678 = vmatpush1.msra.mxu0 0.0
    %1679 = vmatprep.subr.mxu0 0.0
    %1680 = vmatpush1.msra.mxu0 0.0
    %1681 = vmatprep.subr.mxu0 0.0
    %1682 = vmatpush1.msra.mxu0 0.0
    %1683 = vmatprep.subr.mxu0 0.0
    %1684 = vmatpush1.msra.mxu0 0.0
    %1685 = vmatprep.subr.mxu0 0.0
    %1686 = vmatpush1.msra.mxu0 0.0
    %1687 = vmatprep.subr.mxu0 0.0
    %1688 = vmatpush1.msra.mxu0 0.0
    %1689 = vmatprep.subr.mxu0 0.0
    %1690 = vmatpush1.msra.mxu0 0.0
    %1691 = vmatprep.subr.mxu0 0.0
    %1692 = vmatpush1.msra.mxu0 0.0
    %1693 = vmatprep.subr.mxu0 0.0
    %1694 = vmatpush1.msra.mxu0 0.0
    %1695 = vmatprep.subr.mxu0 0.0
    %1696 = vmatpush1.msra.mxu0 0.0
    %1697 = vmatprep.subr.mxu0 0.0
    %1698 = vmatpush1.msra.mxu0 0.0
    %1699 = vmatprep.subr.mxu0 0.0
    %1700 = vmatpush1.msra.mxu0 0.0
    %1701 = vmatprep.subr.mxu0 0.0
    %1702 = vmatpush1.msra.mxu0 0.0
    %1703 = vmatprep.subr.mxu0 0.0
    %1704 = vmatpush1.msra.mxu0 0.0
    %1705 = vmatprep.subr.mxu0 0.0
    %1706 = vmatpush1.msra.mxu0 0.0
    %1707 = vmatprep.subr.mxu0 0.0
    %1708 = vmatpush1.msra.mxu0 0.0
    %1709 = vmatprep.subr.mxu0 0.0
    %1710 = vmatpush1.msra.mxu0 0.0
    %1711 = vmatprep.subr.mxu0 0.0
    %1712 = vmatpush1.msra.mxu0 0.0
    %1713 = vmatprep.subr.mxu0 0.0
    %1714 = vmatpush1.msra.mxu0 0.0
    %1715 = vmatprep.subr.mxu0 0.0
    %1716 = vmatpush1.msra.mxu0 0.0
    %1717 = vmatprep.subr.mxu0 0.0
    %1718 = vmatpush1.msra.mxu0 0.0
    %1719 = vmatprep.subr.mxu0 0.0
    %1720 = vmatpush1.msra.mxu0 0.0
    %1721 = vmatprep.mubr.f32.mxu0 0.0
    %1722 = vmatmul.mubr.f32.gmra.mrb[0].mxu0 %v1655
    %v1723 = vpop.f32.mrb[0].mxu0
    %v1724 = vadd.f32 %v1650, %v1723
    %v1725 = vpop.f32.mrb[0].mxu0
    %1726 = vdwg.mxu0
    %v1727 = vmax.f32 %v1724, 0.0
    %v1728 = vld [vmem:[%s9] sm:$0xff]
    %v1729 = vld [vmem:[%s9 + $0x8] sm:$0xff]
    %v1730 = vld [vmem:[%s10] sm:$0x1]
    %v1732 = vlaneseq
    %v1733 = vshrl.u32 %v1732, 7
    %v1734 = vsub.s32 0, %v1733
    %v1735 = vrot.slane %v1730, %v1734
    %vm1737 = vcmask 130048
    %v1739 = vsel %vm1737, %v1727, 0
    %1741 = vmatprep.subr.mxu0 0.0
    %1742 = vmatpush1.msra.mxu0 %v1728
    %1743 = vmatprep.subr.mxu0 0.0
    %1744 = vmatpush1.msra.mxu0 %v1729
    %1745 = vmatprep.subr.mxu0 0.0
    %1746 = vmatpush1.msra.mxu0 0.0
    %1747 = vmatprep.subr.mxu0 0.0
    %1748 = vmatpush1.msra.mxu0 0.0
    %1749 = vmatprep.subr.mxu0 0.0
    %1750 = vmatpush1.msra.mxu0 0.0
    %1751 = vmatprep.subr.mxu0 0.0
    %1752 = vmatpush1.msra.mxu0 0.0
    %1753 = vmatprep.subr.mxu0 0.0
    %1754 = vmatpush1.msra.mxu0 0.0
    %1755 = vmatprep.subr.mxu0 0.0
    %1756 = vmatpush1.msra.mxu0 0.0
    %1757 = vmatprep.subr.mxu0 0.0
    %1758 = vmatpush1.msra.mxu0 0.0
    %1759 = vmatprep.subr.mxu0 0.0
    %1760 = vmatpush1.msra.mxu0 0.0
    %1761 = vmatprep.subr.mxu0 0.0
    %1762 = vmatpush1.msra.mxu0 0.0
    %1763 = vmatprep.subr.mxu0 0.0
    %1764 = vmatpush1.msra.mxu0 0.0
    %1765 = vmatprep.subr.mxu0 0.0
    %1766 = vmatpush1.msra.mxu0 0.0
    %1767 = vmatprep.subr.mxu0 0.0
    %1768 = vmatpush1.msra.mxu0 0.0
    %1769 = vmatprep.subr.mxu0 0.0
    %1770 = vmatpush1.msra.mxu0 0.0
    %1771 = vmatprep.subr.mxu0 0.0
    %1772 = vmatpush1.msra.mxu0 0.0
    %1773 = vmatprep.subr.mxu0 0.0
    %1774 = vmatpush1.msra.mxu0 0.0
    %1775 = vmatprep.subr.mxu0 0.0
    %1776 = vmatpush1.msra.mxu0 0.0
    %1777 = vmatprep.subr.mxu0 0.0
    %1778 = vmatpush1.msra.mxu0 0.0
    %1779 = vmatprep.subr.mxu0 0.0
    %1780 = vmatpush1.msra.mxu0 0.0
    %1781 = vmatprep.subr.mxu0 0.0
    %1782 = vmatpush1.msra.mxu0 0.0
    %1783 = vmatprep.subr.mxu0 0.0
    %1784 = vmatpush1.msra.mxu0 0.0
    %1785 = vmatprep.subr.mxu0 0.0
    %1786 = vmatpush1.msra.mxu0 0.0
    %1787 = vmatprep.subr.mxu0 0.0
    %1788 = vmatpush1.msra.mxu0 0.0
    %1789 = vmatprep.subr.mxu0 0.0
    %1790 = vmatpush1.msra.mxu0 0.0
    %1791 = vmatprep.subr.mxu0 0.0
    %1792 = vmatpush1.msra.mxu0 0.0
    %1793 = vmatprep.subr.mxu0 0.0
    %1794 = vmatpush1.msra.mxu0 0.0
    %1795 = vmatprep.subr.mxu0 0.0
    %1796 = vmatpush1.msra.mxu0 0.0
    %1797 = vmatprep.subr.mxu0 0.0
    %1798 = vmatpush1.msra.mxu0 0.0
    %1799 = vmatprep.subr.mxu0 0.0
    %1800 = vmatpush1.msra.mxu0 0.0
    %1801 = vmatprep.subr.mxu0 0.0
    %1802 = vmatpush1.msra.mxu0 0.0
    %1803 = vmatprep.subr.mxu0 0.0
    %1804 = vmatpush1.msra.mxu0 0.0
    %1805 = vmatprep.mubr.f32.mxu0 0.0
    %1806 = vmatmul.mubr.f32.gmra.mrb[0].mxu0 %v1739
    %v1807 = vpop.f32.mrb[0].mxu0
    %v1808 = vadd.f32 %v1735, %v1807
    %v1809 = vpop.f32.mrb[0].mxu0
    %1810 = vdwg.mxu0
    %vm1811 = vcmask 17408
    %1812 = vst.msk [vmem:[#allocation2] sm:$0x3] %vm1811, %v1808
    // Predicated region
    $region46: #{tpu_custom_call.1} parent=1 // pred_check
      _
    $region47: #{tpu_custom_call.1} parent=1 // pred_check_branch
      %1814 = sbr.rel (0) target = $region49
    $region48: #{tpu_custom_call.1} parent=1 // pred_region
      %s1816 = ssub.s32 32, 32
      %1817 = vsyncadd [#allocation3], %s1816
      %s1819 = sshll.u32 [#allocation2], 4
      %s1820 = int_to_ptr.vmem [resolvable:$true] %s1819
      %1822 = dma.vmem_to_hbm [thread:$0]  %s1820, 32, %s11, [#allocation3]
    $region49: #{tpu_custom_call.1} parent=1 // pred_fallthru
      _
    // Predicated region
    $region50: #{tpu_custom_call.1} parent=1 // pred_check
      _
    $region51: #{tpu_custom_call.1} parent=1 // pred_check_branch
      %1824 = sbr.rel (0) target = $region53
    $region52: #{tpu_custom_call.1} parent=1 // pred_region
      %1825 = dma.done [#allocation3], 32
    $region53: #{tpu_custom_call.1} parent=1 // pred_fallthru
      _
    %1826 = vsyncpa [#allocation3], 1

</llo_original>
